<compile_context>
chip_gen: v7x
topology: tpu7x:2x2x1
jax: 0.10.0
libtpu: 0.0.40
codegen_flags: <defaults>
</compile_context>

<pallas_src>
import functools

import jax
import jax.numpy as jnp
from jax.experimental import pallas as pl
from jax.experimental.pallas import tpu as pltpu


def _round_up(v, m):
    return (v + m - 1) // m * m


def _resgcn_kernel(adj_hbm, x_ref, w0_ref, ws_ref, bs_ref, wlin_ref, blin_ref,
                   o_ref, adj_vmem, adj_sem, *, n_gc_layers):
    """refs = (adj[HBM], x, W0, Ws_stack, b_stack, W_lin, b_lin, out, adj_vmem, adj_sem)."""
    # Kick off the dominant HBM transfer (the N x N adjacency) immediately and
    # hide it behind the layer-0 feature transform, which does not need adj.
    adj_cp = pltpu.make_async_copy(adj_hbm, adj_vmem, adj_sem)
    adj_cp.start()

    # Layer 0 feature transform: (N, F) @ (F, H), bf16 operands, f32 accumulate.
    xw = jnp.dot(x_ref[...], w0_ref[...],
                 preferred_element_type=jnp.float32) + bs_ref[0]

    adj_cp.wait()

    # Layer 0 aggregation + ReLU (no residual on the first layer).
    h = jnp.maximum(
        jnp.dot(adj_vmem[...], xw.astype(jnp.bfloat16),
                preferred_element_type=jnp.float32), 0.0)

    # Remaining GraphConv layers with residual connections.  Static unroll with
    # static slices into the stacked weight/bias refs (zero-cost ref views).
    # NOTE: adj @ (xW + b) == adj @ (xW) + b only if adj is row-stochastic, so
    # the bias stays before the aggregation to preserve exact module semantics.
    for l in range(1, n_gc_layers):
        xw = jnp.dot(h.astype(jnp.bfloat16), ws_ref[l - 1],
                     preferred_element_type=jnp.float32) + bs_ref[l]
        agg = jnp.dot(adj_vmem[...], xw.astype(jnp.bfloat16),
                      preferred_element_type=jnp.float32)
        # TODO(synk): dropout is inference-mode identity; training mode would
        # need pltpu.prng_seed / prng_random_bits masking here.
        h = jnp.maximum(agg, 0.0) + h

    # Final linear head, written into a lane-dense (N, 128*k) slab.
    out = jnp.dot(h.astype(jnp.bfloat16), wlin_ref[...],
                  preferred_element_type=jnp.float32) + blin_ref[...]
    o_ref[...] = out.astype(o_ref.dtype)


def resgcn_forward(x, adj, gc_params, lin_params):
    """x: (N, n_feat) f32, adj: (N, N) f32, gc_params: [(W, b), ...], lin_params: (W, b)."""
    n, n_feat = x.shape
    n_hid = gc_params[0][0].shape[1]
    n_classes = lin_params[0].shape[1]
    n_layers = len(gc_params)

    h_pad = _round_up(n_hid, 128)      # fill MXU output width
    c_pad = _round_up(n_classes, 128)  # lane-dense output stores

    def pad2(w, r, c):
        return jnp.pad(w, ((0, r - w.shape[0]), (0, c - w.shape[1])))

    # bf16 for everything feeding the MXU (adj, x, weights); biases stay f32.
    adj_bf = adj.astype(jnp.bfloat16)
    x_bf = x.astype(jnp.bfloat16)
    w0 = pad2(gc_params[0][0], n_feat, h_pad).astype(jnp.bfloat16)
    if n_layers > 1:
        ws = jnp.stack([pad2(w, h_pad, h_pad) for (w, _) in gc_params[1:]])
    else:
        ws = jnp.zeros((1, h_pad, h_pad), jnp.float32)   # unused placeholder
    ws = ws.astype(jnp.bfloat16)
    bs = jnp.stack([jnp.pad(b, (0, h_pad - b.shape[0])).reshape(1, -1)
                    for (_, b) in gc_params]).astype(jnp.float32)        # (L, 1, H)
    wlin = pad2(lin_params[0], h_pad, c_pad).astype(jnp.bfloat16)
    blin = jnp.pad(lin_params[1], (0, c_pad - n_classes)).reshape(1, -1).astype(jnp.float32)

    # ---- VMEM budget (single-buffered adj scratch + double-buffered small inputs) ----
    dbl = 2
    vmem_need = (
        n * n * 2                                                        # adj scratch
        + dbl * (x_bf.size * 2 + w0.size * 2 + ws.size * 2 + bs.size * 4
                 + wlin.size * 2 + blin.size * 4)                        # auto-pipelined inputs
        + dbl * n * c_pad * 4                                            # out block
        + 4 * n * h_pad * 4                                              # h / xw / agg f32 temps
    )
    try:
        vmem_cap = pltpu.get_tpu_info().vmem_capacity_bytes              # 64 MiB on v7x, 128 MiB v5e/v6e
    except Exception:
        vmem_cap = 64 * 1024 * 1024                                      # v7x-safe fallback
    vmem_limit = int(min(vmem_cap - 8 * 1024 * 1024,
                         max(vmem_need * 5 // 4, 32 * 1024 * 1024)))
    if vmem_need > vmem_limit:
        # TODO(synk): row-tiled adj streaming path (adj BlockSpec (TM, N) per layer
        # while h stays resident) for graphs whose adjacency exceeds VMEM.
        raise ValueError(
            f"Fused ResGCN kernel needs ~{vmem_need} B of VMEM but only "
            f"{vmem_limit} B are available on this core; use a row-tiled adj path.")

    # Full-array blocks, single grid step (every layer aggregates over all rows,
    # so the whole activation matrix must stay resident anyway).
    in_specs = [
        pl.BlockSpec(memory_space=pl.ANY),                 # adj: manual DMA, single-buffered
        pl.BlockSpec(x_bf.shape, lambda i: (0, 0)),
        pl.BlockSpec(w0.shape, lambda i: (0, 0)),
        pl.BlockSpec(ws.shape, lambda i: (0, 0, 0)),
        pl.BlockSpec(bs.shape, lambda i: (0, 0, 0)),
        pl.BlockSpec(wlin.shape, lambda i: (0, 0)),
        pl.BlockSpec(blin.shape, lambda i: (0, 0)),
    ]
    out_spec = pl.BlockSpec((n, c_pad), lambda i: (0, 0))

    # Advisory cost estimate for the XLA scheduler.
    flops = 2 * n * n_feat * h_pad + 2 * n * n * h_pad
    flops += (n_layers - 1) * (2 * n * h_pad * h_pad + 2 * n * n * h_pad)
    flops += 2 * n * h_pad * c_pad
    bytes_accessed = int(adj_bf.size * 2 + x_bf.size * 2 + w0.size * 2 + ws.size * 2
                         + bs.size * 4 + wlin.size * 2 + blin.size * 4 + n * c_pad * 4)

    out_padded = pl.pallas_call(
        functools.partial(_resgcn_kernel, n_gc_layers=n_layers),
        out_shape=jax.ShapeDtypeStruct((n, c_pad), jnp.float32),
        grid_spec=pltpu.PrefetchScalarGridSpec(
            num_scalar_prefetch=0,
            grid=(1,),
            in_specs=in_specs,
            out_specs=out_spec,
            scratch_shapes=[
                pltpu.VMEM((n, n), jnp.bfloat16),          # adj landing buffer
                pltpu.SemaphoreType.DMA(()),
            ],
        ),
        compiler_params=pltpu.CompilerParams(
            dimension_semantics=("arbitrary",),
            vmem_limit_bytes=vmem_limit,
        ),
        cost_estimate=pl.CostEstimate(
            flops=int(flops), transcendentals=0, bytes_accessed=bytes_accessed),
    )(adj_bf, x_bf, w0, ws, bs, wlin, blin)

    # TODO(synk): on v7x, split the aggregation rows across both TensorCores
    # (core_map + VMEM_SHARED h + per-layer core_barrier) for ~2x at MXU-bound sizes.
    return out_padded[:, :n_classes]


def init_params(key, n_feat, n_hid, n_classes, n_layers, dtype=jnp.float32):
    """nn.Linear-style uniform(-1/sqrt(fan_in), +1/sqrt(fan_in)) init."""
    gc_dims = [(n_feat, n_hid)] + [(n_hid, n_hid)] * (n_layers - 1)
    gc_params = []
    for fan_in, fan_out in gc_dims:
        key, kw, kb = jax.random.split(key, 3)
        bound = 1.0 / (fan_in ** 0.5)
        gc_params.append((
            jax.random.uniform(kw, (fan_in, fan_out), dtype, -bound, bound),
            jax.random.uniform(kb, (fan_out,), dtype, -bound, bound)))
    key, kw, kb = jax.random.split(key, 3)
    bound = 1.0 / (n_hid ** 0.5)
    lin_params = (
        jax.random.uniform(kw, (n_hid, n_classes), dtype, -bound, bound),
        jax.random.uniform(kb, (n_classes,), dtype, -bound, bound))
    return gc_params, lin_params


if __name__ == "__main__":
    # Small full-graph shapes consistent with the module.
    n_nodes, n_feat, n_hid, n_classes, n_layers = 256, 64, 64, 16, 3

    key = jax.random.PRNGKey(0)
    key, kx, ka = jax.random.split(key, 3)
    x = jax.random.normal(kx, (n_nodes, n_feat), jnp.float32)

    # Row-normalized random adjacency with self-loops (typical GCN preprocessing).
    a = (jax.random.uniform(ka, (n_nodes, n_nodes)) < 0.05).astype(jnp.float32)
    a = a + jnp.eye(n_nodes, dtype=jnp.float32)
    adj = a / jnp.sum(a, axis=1, keepdims=True)

    gc_params, lin_params = init_params(key, n_feat, n_hid, n_classes, n_layers)

    out = resgcn_forward(x, adj, gc_params, lin_params)
    out = jax.block_until_ready(out)

    # Plain-JAX reference with matched bf16-operand / f32-accumulate numerics
    # (zero-padding in the kernel is numerically exact, so the unpadded
    # reference must match).
    def mm(a_, b_):
        return jnp.dot(a_.astype(jnp.bfloat16), b_.astype(jnp.bfloat16),
                       preferred_element_type=jnp.float32)

    h = x
    for l, (w, b) in enumerate(gc_params):
        act = jnp.maximum(mm(adj, mm(h, w) + b), 0.0)
        h = act + h if l > 0 else act
    ref = mm(h, lin_params[0]) + lin_params[1]

    assert out.shape == (n_nodes, n_classes)
    assert jnp.allclose(out, ref, atol=5e-3, rtol=5e-3), float(jnp.max(jnp.abs(out - ref)))

    print("KERNEL_OK")
</pallas_src>

<mosaic_0001>
module attributes {stable_mosaic.version = 11 : i64} {
  func.func @_resgcn_kernel(%arg0: i32, %arg1: memref<256x256xbf16, #tpu.memory_space<any>>, %arg2: memref<256x64xbf16, #tpu.memory_space<vmem>>, %arg3: memref<64x128xbf16, #tpu.memory_space<vmem>>, %arg4: memref<2x128x128xbf16, #tpu.memory_space<vmem>>, %arg5: memref<3x1x128xf32, #tpu.memory_space<vmem>>, %arg6: memref<128x128xbf16, #tpu.memory_space<vmem>>, %arg7: memref<1x128xf32, #tpu.memory_space<vmem>>, %arg8: memref<256x128xf32, #tpu.memory_space<vmem>>, %arg9: memref<256x256xbf16, #tpu.memory_space<vmem>>, %arg10: memref<!tpu.dma_semaphore, #tpu.memory_space<semaphore_mem>>) attributes {dimension_semantics = [#tpu.dimension_semantics<arbitrary>], iteration_bounds = array<i64: 1>, scalar_prefetch = 0 : i64, scratch_operands = 2 : i64, tpu.core_type = #tpu.core_type<tc>, window_params = [{}, {pipeline_mode = #tpu.pipeline_mode<synchronous>, transform_indices = @transform_1, window_bounds = array<i64: 256, 64>}, {pipeline_mode = #tpu.pipeline_mode<synchronous>, transform_indices = @transform_2, window_bounds = array<i64: 64, 128>}, {pipeline_mode = #tpu.pipeline_mode<synchronous>, transform_indices = @transform_3, window_bounds = array<i64: 2, 128, 128>}, {pipeline_mode = #tpu.pipeline_mode<synchronous>, transform_indices = @transform_4, window_bounds = array<i64: 3, 1, 128>}, {pipeline_mode = #tpu.pipeline_mode<synchronous>, transform_indices = @transform_5, window_bounds = array<i64: 128, 128>}, {pipeline_mode = #tpu.pipeline_mode<synchronous>, transform_indices = @transform_6, window_bounds = array<i64: 1, 128>}, {pipeline_mode = #tpu.pipeline_mode<synchronous>, transform_indices = @transform_7, window_bounds = array<i64: 256, 128>}]} {
    tpu.enqueue_dma source(%arg1 : memref<256x256xbf16, #tpu.memory_space<any>>) target(%arg9 : memref<256x256xbf16, #tpu.memory_space<vmem>>) target_semaphore(%arg10 : memref<!tpu.dma_semaphore, #tpu.memory_space<semaphore_mem>>)
    %c0 = arith.constant 0 : index
    %c0_0 = arith.constant 0 : index
    %0 = vector.load %arg2[%c0, %c0_0] : memref<256x64xbf16, #tpu.memory_space<vmem>>, vector<256x64xbf16>
    %c0_1 = arith.constant 0 : index
    %c0_2 = arith.constant 0 : index
    %1 = vector.load %arg3[%c0_1, %c0_2] : memref<64x128xbf16, #tpu.memory_space<vmem>>, vector<64x128xbf16>
    %cst = arith.constant dense<0.000000e+00> : vector<256x128xf32>
    %2 = tpu.matmul %0, %1, %cst {dimension_numbers = #tpu.dot_dimension_numbers<[1], [0], [0], [1], [0, 0, 1, 1], [], []>} : vector<256x64xbf16>, vector<64x128xbf16>, vector<256x128xf32> -> vector<256x128xf32>
    %c0_3 = arith.constant 0 : index
    %c0_4 = arith.constant 0 : index
    %c0_5 = arith.constant 0 : index
    %3 = vector.load %arg5[%c0_3, %c0_4, %c0_5] : memref<3x1x128xf32, #tpu.memory_space<vmem>>, vector<1x1x128xf32>
    %4 = vector.shape_cast %3 : vector<1x1x128xf32> to vector<1x128xf32>
    %5 = vector.broadcast %4 : vector<1x128xf32> to vector<256x128xf32>
    %6 = arith.addf %2, %5 : vector<256x128xf32>
    tpu.wait_dma2 semaphore(%arg10 : memref<!tpu.dma_semaphore, #tpu.memory_space<semaphore_mem>>) src(%arg1 : memref<256x256xbf16, #tpu.memory_space<any>>) dst(%arg9 : memref<256x256xbf16, #tpu.memory_space<vmem>>)
    %c0_6 = arith.constant 0 : index
    %c0_7 = arith.constant 0 : index
    %7 = vector.load %arg9[%c0_6, %c0_7] : memref<256x256xbf16, #tpu.memory_space<vmem>>, vector<256x256xbf16>
    %8 = arith.truncf %6 : vector<256x128xf32> to vector<256x128xbf16>
    %cst_8 = arith.constant dense<0.000000e+00> : vector<256x128xf32>
    %9 = tpu.matmul %7, %8, %cst_8 {dimension_numbers = #tpu.dot_dimension_numbers<[1], [0], [0], [1], [0, 0, 1, 1], [], []>} : vector<256x256xbf16>, vector<256x128xbf16>, vector<256x128xf32> -> vector<256x128xf32>
    %cst_9 = arith.constant 0.000000e+00 : f32
    %10 = vector.broadcast %cst_9 : f32 to vector<256x128xf32>
    %11 = arith.maximumf %9, %10 : vector<256x128xf32>
    %12 = arith.truncf %11 : vector<256x128xf32> to vector<256x128xbf16>
    %c0_10 = arith.constant 0 : index
    %c0_11 = arith.constant 0 : index
    %c0_12 = arith.constant 0 : index
    %13 = vector.load %arg4[%c0_10, %c0_11, %c0_12] : memref<2x128x128xbf16, #tpu.memory_space<vmem>>, vector<1x128x128xbf16>
    %14 = vector.shape_cast %13 : vector<1x128x128xbf16> to vector<128x128xbf16>
    %cst_13 = arith.constant dense<0.000000e+00> : vector<256x128xf32>
    %15 = tpu.matmul %12, %14, %cst_13 {dimension_numbers = #tpu.dot_dimension_numbers<[1], [0], [0], [1], [0, 0, 1, 1], [], []>} : vector<256x128xbf16>, vector<128x128xbf16>, vector<256x128xf32> -> vector<256x128xf32>
    %c1 = arith.constant 1 : index
    %c0_14 = arith.constant 0 : index
    %c0_15 = arith.constant 0 : index
    %16 = vector.load %arg5[%c1, %c0_14, %c0_15] : memref<3x1x128xf32, #tpu.memory_space<vmem>>, vector<1x1x128xf32>
    %17 = vector.shape_cast %16 : vector<1x1x128xf32> to vector<1x128xf32>
    %18 = vector.broadcast %17 : vector<1x128xf32> to vector<256x128xf32>
    %19 = arith.addf %15, %18 : vector<256x128xf32>
    %c0_16 = arith.constant 0 : index
    %c0_17 = arith.constant 0 : index
    %20 = vector.load %arg9[%c0_16, %c0_17] : memref<256x256xbf16, #tpu.memory_space<vmem>>, vector<256x256xbf16>
    %21 = arith.truncf %19 : vector<256x128xf32> to vector<256x128xbf16>
    %cst_18 = arith.constant dense<0.000000e+00> : vector<256x128xf32>
    %22 = tpu.matmul %20, %21, %cst_18 {dimension_numbers = #tpu.dot_dimension_numbers<[1], [0], [0], [1], [0, 0, 1, 1], [], []>} : vector<256x256xbf16>, vector<256x128xbf16>, vector<256x128xf32> -> vector<256x128xf32>
    %cst_19 = arith.constant 0.000000e+00 : f32
    %23 = vector.broadcast %cst_19 : f32 to vector<256x128xf32>
    %24 = arith.maximumf %22, %23 : vector<256x128xf32>
    %25 = arith.addf %24, %11 : vector<256x128xf32>
    %26 = arith.truncf %25 : vector<256x128xf32> to vector<256x128xbf16>
    %c1_20 = arith.constant 1 : index
    %c0_21 = arith.constant 0 : index
    %c0_22 = arith.constant 0 : index
    %27 = vector.load %arg4[%c1_20, %c0_21, %c0_22] : memref<2x128x128xbf16, #tpu.memory_space<vmem>>, vector<1x128x128xbf16>
    %28 = vector.shape_cast %27 : vector<1x128x128xbf16> to vector<128x128xbf16>
    %cst_23 = arith.constant dense<0.000000e+00> : vector<256x128xf32>
    %29 = tpu.matmul %26, %28, %cst_23 {dimension_numbers = #tpu.dot_dimension_numbers<[1], [0], [0], [1], [0, 0, 1, 1], [], []>} : vector<256x128xbf16>, vector<128x128xbf16>, vector<256x128xf32> -> vector<256x128xf32>
    %c2 = arith.constant 2 : index
    %c0_24 = arith.constant 0 : index
    %c0_25 = arith.constant 0 : index
    %30 = vector.load %arg5[%c2, %c0_24, %c0_25] : memref<3x1x128xf32, #tpu.memory_space<vmem>>, vector<1x1x128xf32>
    %31 = vector.shape_cast %30 : vector<1x1x128xf32> to vector<1x128xf32>
    %32 = vector.broadcast %31 : vector<1x128xf32> to vector<256x128xf32>
    %33 = arith.addf %29, %32 : vector<256x128xf32>
    %c0_26 = arith.constant 0 : index
    %c0_27 = arith.constant 0 : index
    %34 = vector.load %arg9[%c0_26, %c0_27] : memref<256x256xbf16, #tpu.memory_space<vmem>>, vector<256x256xbf16>
    %35 = arith.truncf %33 : vector<256x128xf32> to vector<256x128xbf16>
    %cst_28 = arith.constant dense<0.000000e+00> : vector<256x128xf32>
    %36 = tpu.matmul %34, %35, %cst_28 {dimension_numbers = #tpu.dot_dimension_numbers<[1], [0], [0], [1], [0, 0, 1, 1], [], []>} : vector<256x256xbf16>, vector<256x128xbf16>, vector<256x128xf32> -> vector<256x128xf32>
    %cst_29 = arith.constant 0.000000e+00 : f32
    %37 = vector.broadcast %cst_29 : f32 to vector<256x128xf32>
    %38 = arith.maximumf %36, %37 : vector<256x128xf32>
    %39 = arith.addf %38, %25 : vector<256x128xf32>
    %40 = arith.truncf %39 : vector<256x128xf32> to vector<256x128xbf16>
    %c0_30 = arith.constant 0 : index
    %c0_31 = arith.constant 0 : index
    %41 = vector.load %arg6[%c0_30, %c0_31] : memref<128x128xbf16, #tpu.memory_space<vmem>>, vector<128x128xbf16>
    %cst_32 = arith.constant dense<0.000000e+00> : vector<256x128xf32>
    %42 = tpu.matmul %40, %41, %cst_32 {dimension_numbers = #tpu.dot_dimension_numbers<[1], [0], [0], [1], [0, 0, 1, 1], [], []>} : vector<256x128xbf16>, vector<128x128xbf16>, vector<256x128xf32> -> vector<256x128xf32>
    %c0_33 = arith.constant 0 : index
    %c0_34 = arith.constant 0 : index
    %43 = vector.load %arg7[%c0_33, %c0_34] : memref<1x128xf32, #tpu.memory_space<vmem>>, vector<1x128xf32>
    %44 = vector.broadcast %43 : vector<1x128xf32> to vector<256x128xf32>
    %45 = arith.addf %42, %44 : vector<256x128xf32>
    %c0_35 = arith.constant 0 : index
    %c0_36 = arith.constant 0 : index
    %46 = vector.load %arg8[%c0_35, %c0_36] : memref<256x128xf32, #tpu.memory_space<vmem>>, vector<256x128xf32>
    tpu.vector_store %arg8[%c0_35, %c0_36], %45 {strides = array<i32>} : memref<256x128xf32, #tpu.memory_space<vmem>>, vector<256x128xf32>,
    return
  }
  func.func @transform_1(%arg0: i32) -> (i32, i32) {
    %c0_i32 = arith.constant 0 : i32
    %c0_i32_0 = arith.constant 0 : i32
    %c0_i32_1 = arith.constant 0 : i32
    return %c0_i32, %c0_i32_0 : i32, i32
  }
  func.func @transform_2(%arg0: i32) -> (i32, i32) {
    %c0_i32 = arith.constant 0 : i32
    %c0_i32_0 = arith.constant 0 : i32
    %c0_i32_1 = arith.constant 0 : i32
    return %c0_i32, %c0_i32_0 : i32, i32
  }
  func.func @transform_3(%arg0: i32) -> (i32, i32, i32) {
    %c0_i32 = arith.constant 0 : i32
    %c0_i32_0 = arith.constant 0 : i32
    %c0_i32_1 = arith.constant 0 : i32
    %c0_i32_2 = arith.constant 0 : i32
    return %c0_i32, %c0_i32_0, %c0_i32_1 : i32, i32, i32
  }
  func.func @transform_4(%arg0: i32) -> (i32, i32, i32) {
    %c0_i32 = arith.constant 0 : i32
    %c0_i32_0 = arith.constant 0 : i32
    %c0_i32_1 = arith.constant 0 : i32
    %c0_i32_2 = arith.constant 0 : i32
    return %c0_i32, %c0_i32_0, %c0_i32_1 : i32, i32, i32
  }
  func.func @transform_5(%arg0: i32) -> (i32, i32) {
    %c0_i32 = arith.constant 0 : i32
    %c0_i32_0 = arith.constant 0 : i32
    %c0_i32_1 = arith.constant 0 : i32
    return %c0_i32, %c0_i32_0 : i32, i32
  }
  func.func @transform_6(%arg0: i32) -> (i32, i32) {
    %c0_i32 = arith.constant 0 : i32
    %c0_i32_0 = arith.constant 0 : i32
    %c0_i32_1 = arith.constant 0 : i32
    return %c0_i32, %c0_i32_0 : i32, i32
  }
  func.func @transform_7(%arg0: i32) -> (i32, i32) {
    %c0_i32 = arith.constant 0 : i32
    %c0_i32_0 = arith.constant 0 : i32
    %c0_i32_1 = arith.constant 0 : i32
    return %c0_i32, %c0_i32_0 : i32, i32
  }
}

</mosaic_0001>

<llo_original>
// kernel: tpu_custom_call.1
$region0: #{tpu_custom_call.1}
  #allocation0 [shape = 'u32[]', space=smem, size = 0x4, offset = 0x4, fixed_abs, tag = 'smem constant byte address 0x4 - core index']
  #allocation1 [shape = 'u32[144,128]{1,0:T(1,128)}', space=vmem, size = 0x12000, scoped, tag = 'internal scratch']
  #allocation2 [shape = 'bf16[256,256]{1,0:T(16,128)(2,1)}', space=vmem, size = 0x20000, scoped, tag = 'scratch operand']
  #allocation3 [shape = 's32[1]{0}', space=sflag, size = 0x4, scoped, tag = 'scratch operand']
  #allocation8 [shape = 's32[]', space=sflag, size = 0x4, offset = 0, fixed_abs, tag = 'sflag constant byte address 0x0 - dummy sync flag']
  %s0 = inlined_call_operand.hbm [shape: bf16[256,256], index: 0, kind: input, shape index: {}]
  %s1 = inlined_call_operand.vmem [shape: bf16[256,64], index: 1, kind: input, shape index: {}]
  %s2 = inlined_call_operand.hbm [shape: bf16[64,128], index: 2, kind: input, shape index: {}]
  %s3 = inlined_call_operand.vmem [shape: bf16[2,128,128], index: 3, kind: input, shape index: {}]
  %s4 = inlined_call_operand.vmem [shape: f32[3,1,128], index: 4, kind: input, shape index: {}]
  %s5 = inlined_call_operand.vmem [shape: bf16[128,128], index: 5, kind: input, shape index: {}]
  %s6 = inlined_call_operand.vmem [shape: f32[1,128], index: 6, kind: input, shape index: {}]
  %s7 = inlined_call_operand.hbm [shape: f32[256,128], index: 7, kind: output, shape index: {}]
  %s8 = sld [smem:[#allocation0]]
  $region38: #{tpu_custom_call.1} parent=0
    _
  %s10 = ssub.s32 1, %s8
  %s11 = scalar_select 0, %s10, %s8
  $region1: #{tpu_custom_call.1} parent=0
    #allocation4 [shape = 'u8[16384]{0}', space=vmem, size = 0x4000, scoped, tag = 'input window, operand 2, single buffered']
    #allocation5 [shape = 's32[1]{0}', space=sflag, size = 0x4, scoped, tag = 'scoped memory for tpu_custom_call.1']
    #allocation6 [shape = 's32[1]{0}', space=sflag, size = 0x4, scoped, tag = 'scoped memory for tpu_custom_call.1']
    #allocation7 [shape = 'u8[131072]{0}', space=vmem, size = 0x20000, scoped, tag = 'output window, operand 0, single buffered']
    #allocation9 [shape = 'u32[9]{0}', space=smem, size = 0x24, scoped, tag = 'DMA stride descriptor']
    %12 = vsyncpa [#allocation5], 0
    %13 = vsyncpa [#allocation6], 0
    // Predicated region
    $region2: #{tpu_custom_call.1} parent=1 // pred_check
      _
    $region3: #{tpu_custom_call.1} parent=1 // pred_check_branch
      %15 = sbr.rel (0) target = $region5
    $region4: #{tpu_custom_call.1} parent=1 // pred_region
      _
    $region5: #{tpu_custom_call.1} parent=1 // pred_fallthru
      _
    // Predicated region
    $region6: #{tpu_custom_call.1} parent=1 // pred_check
      _
    $region7: #{tpu_custom_call.1} parent=1 // pred_check_branch
      %17 = sbr.rel (0) target = $region9
    $region8: #{tpu_custom_call.1} parent=1 // pred_region
      %s19 = ssub.s32 512, 512
      %20 = vsyncadd [#allocation5], %s19
      %s21 = sshll.u32 [#allocation4], 4
      %s22 = int_to_ptr.vmem [resolvable:$true] %s21
      %27 = dma.hbm_to_vmem [thread:$0]  %s2, 512, %s22, [#allocation5], 64, 64, 4
    $region9: #{tpu_custom_call.1} parent=1 // pred_fallthru
      _
    // Predicated region
    $region10: #{tpu_custom_call.1} parent=1 // pred_check
      _
    $region11: #{tpu_custom_call.1} parent=1 // pred_check_branch
      %29 = sbr.rel (0) target = $region13
    $region12: #{tpu_custom_call.1} parent=1 // pred_region
      _
    $region13: #{tpu_custom_call.1} parent=1 // pred_fallthru
      _
    // Predicated region
    $region14: #{tpu_custom_call.1} parent=1 // pred_check
      _
    $region15: #{tpu_custom_call.1} parent=1 // pred_check_branch
      %31 = sbr.rel (0) target = $region17
    $region16: #{tpu_custom_call.1} parent=1 // pred_region
      _
    $region17: #{tpu_custom_call.1} parent=1 // pred_fallthru
      _
    // Predicated region
    $region18: #{tpu_custom_call.1} parent=1 // pred_check
      _
    $region19: #{tpu_custom_call.1} parent=1 // pred_check_branch
      %33 = sbr.rel (0) target = $region21
    $region20: #{tpu_custom_call.1} parent=1 // pred_region
      _
    $region21: #{tpu_custom_call.1} parent=1 // pred_fallthru
      _
    // Predicated region
    $region22: #{tpu_custom_call.1} parent=1 // pred_check
      _
    $region23: #{tpu_custom_call.1} parent=1 // pred_check_branch
      %35 = sbr.rel (0) target = $region25
    $region24: #{tpu_custom_call.1} parent=1 // pred_region
      _
    $region25: #{tpu_custom_call.1} parent=1 // pred_fallthru
      _
    // Predicated region
    $region26: #{tpu_custom_call.1} parent=1 // pred_check
      _
    $region27: #{tpu_custom_call.1} parent=1 // pred_check_branch
      %37 = sbr.rel (0) target = $region29
    $region28: #{tpu_custom_call.1} parent=1 // pred_region
      %38 = dma.done [#allocation5], 512
    $region29: #{tpu_custom_call.1} parent=1 // pred_fallthru
      _
    %s41 = sshll.u32 1, 14
    %s42 = sxor.u32 4294967295, %s41
    %s44 = sld [smem:[#allocation0]]
    %s45 = sadd.s32 2, %s44
    %s47 = sshll.u32 7, 26
    %s48 = sxor.u32 4294967295, %s47
    %s49 = sand.u32 0, %s48
    %s50 = sshll.u32 %s45, 26
    %s51 = sor.u32 %s49, %s50
    %s52 = sshll.u32 [#allocation2], 4
    %s53 = int_to_ptr.vmem [resolvable:$true] %s52
    %56 = sst [smem:[#allocation9]] 256
    %s57 = scalar_lea.smem [#allocation9], 1
    %58 = sst [smem:[%s57]] 256
    %s59 = scalar_lea.smem [#allocation9], 2
    %60 = sst [smem:[%s59]] 2
    %s61 = scalar_lea.smem [#allocation9], 3
    %62 = sst [smem:[%s61]] 64
    %s63 = scalar_lea.smem [#allocation9], 4
    %64 = sst [smem:[%s63]] 128
    %s65 = scalar_lea.smem [#allocation9], 5
    %66 = sst [smem:[%s65]] 2
    %s67 = scalar_lea.smem [#allocation9], 6
    %68 = sst [smem:[%s67]] 128
    %s69 = scalar_lea.smem [#allocation9], 7
    %70 = sst [smem:[%s69]] 64
    %s71 = scalar_lea.smem [#allocation9], 8
    %72 = sst [smem:[%s71]] 4
    %74 = dma.general %s0, 4096, %s53, [#allocation3], [#allocation8], [#allocation9], %s51, 0
    %v75 = vld [vmem:[%s1] sm:$0xf]
    %v76 = vld [vmem:[%s1 + $0x4] sm:$0xf]
    %v77 = vld [vmem:[%s1 + $0x8] sm:$0xf]
    %v78 = vld [vmem:[%s1 + $0xc] sm:$0xf]
    %v79 = vld [vmem:[%s1 + $0x10] sm:$0xf]
    %v80 = vld [vmem:[%s1 + $0x14] sm:$0xf]
    %v81 = vld [vmem:[%s1 + $0x18] sm:$0xf]
    %v82 = vld [vmem:[%s1 + $0x1c] sm:$0xf]
    %v83 = vld [vmem:[%s1 + $0x20] sm:$0xf]
    %v84 = vld [vmem:[%s1 + $0x24] sm:$0xf]
    %v85 = vld [vmem:[%s1 + $0x28] sm:$0xf]
    %v86 = vld [vmem:[%s1 + $0x2c] sm:$0xf]
    %v87 = vld [vmem:[%s1 + $0x30] sm:$0xf]
    %v88 = vld [vmem:[%s1 + $0x34] sm:$0xf]
    %v89 = vld [vmem:[%s1 + $0x38] sm:$0xf]
    %v90 = vld [vmem:[%s1 + $0x3c] sm:$0xf]
    %v91 = vld [vmem:[%s1 + $0x40] sm:$0xf]
    %v92 = vld [vmem:[%s1 + $0x44] sm:$0xf]
    %v93 = vld [vmem:[%s1 + $0x48] sm:$0xf]
    %v94 = vld [vmem:[%s1 + $0x4c] sm:$0xf]
    %v95 = vld [vmem:[%s1 + $0x50] sm:$0xf]
    %v96 = vld [vmem:[%s1 + $0x54] sm:$0xf]
    %v97 = vld [vmem:[%s1 + $0x58] sm:$0xf]
    %v98 = vld [vmem:[%s1 + $0x5c] sm:$0xf]
    %v99 = vld [vmem:[%s1 + $0x60] sm:$0xf]
    %v100 = vld [vmem:[%s1 + $0x64] sm:$0xf]
    %v101 = vld [vmem:[%s1 + $0x68] sm:$0xf]
    %v102 = vld [vmem:[%s1 + $0x6c] sm:$0xf]
    %v103 = vld [vmem:[%s1 + $0x70] sm:$0xf]
    %v104 = vld [vmem:[%s1 + $0x74] sm:$0xf]
    %v105 = vld [vmem:[%s1 + $0x78] sm:$0xf]
    %v106 = vld [vmem:[%s1 + $0x7c] sm:$0xf]
    %v107 = vld [vmem:[#allocation4] sm:$0xf]
    %v108 = vld [vmem:[#allocation4 + $0x4] sm:$0xf]
    %v109 = vld [vmem:[#allocation4 + $0x8] sm:$0xf]
    %v110 = vld [vmem:[#allocation4 + $0xc] sm:$0xf]
    %v111 = vld [vmem:[#allocation4 + $0x10] sm:$0xf]
    %v112 = vld [vmem:[#allocation4 + $0x14] sm:$0xf]
    %v113 = vld [vmem:[#allocation4 + $0x18] sm:$0xf]
    %v114 = vld [vmem:[#allocation4 + $0x1c] sm:$0xf]
    %v115 = vld [vmem:[%s4] sm:$0x1]
    %v117 = vlaneseq
    %v118 = vshrl.u32 %v117, 7
    %v119 = vsub.s32 0, %v118
    %v120 = vrot.slane %v115, %v119
    %v154 = vunpack.c.l.b16 %v75
    %v155 = vunpack.c.l.b16 %v76
    %v156 = vunpack.c.l.b16 %v77
    %v157 = vunpack.c.l.b16 %v78
    %v158 = vunpack.c.l.b16 %v79
    %v159 = vunpack.c.l.b16 %v80
    %v160 = vunpack.c.l.b16 %v81
    %v161 = vunpack.c.l.b16 %v82
    %v162 = vunpack.c.l.b16 %v83
    %v163 = vunpack.c.l.b16 %v84
    %v164 = vunpack.c.l.b16 %v85
    %v165 = vunpack.c.l.b16 %v86
    %v166 = vunpack.c.l.b16 %v87
    %v167 = vunpack.c.l.b16 %v88
    %v168 = vunpack.c.l.b16 %v89
    %v169 = vunpack.c.l.b16 %v90
    %v170 = vunpack.c.l.b16 %v91
    %v171 = vunpack.c.l.b16 %v92
    %v172 = vunpack.c.l.b16 %v93
    %v173 = vunpack.c.l.b16 %v94
    %v174 = vunpack.c.l.b16 %v95
    %v175 = vunpack.c.l.b16 %v96
    %v176 = vunpack.c.l.b16 %v97
    %v177 = vunpack.c.l.b16 %v98
    %v178 = vunpack.c.l.b16 %v99
    %v179 = vunpack.c.l.b16 %v100
    %v180 = vunpack.c.l.b16 %v101
    %v181 = vunpack.c.l.b16 %v102
    %v182 = vunpack.c.l.b16 %v103
    %v183 = vunpack.c.l.b16 %v104
    %v184 = vunpack.c.l.b16 %v105
    %v185 = vunpack.c.l.b16 %v106
    %v186 = vpack.c.b16 %v155, %v154
    %v187 = vpack.c.b16 %v157, %v156
    %v188 = vpack.c.b16 %v159, %v158
    %v189 = vpack.c.b16 %v161, %v160
    %v190 = vpack.c.b16 %v163, %v162
    %v191 = vpack.c.b16 %v165, %v164
    %v192 = vpack.c.b16 %v167, %v166
    %v193 = vpack.c.b16 %v169, %v168
    %v194 = vpack.c.b16 %v171, %v170
    %v195 = vpack.c.b16 %v173, %v172
    %v196 = vpack.c.b16 %v175, %v174
    %v197 = vpack.c.b16 %v177, %v176
    %v198 = vpack.c.b16 %v179, %v178
    %v199 = vpack.c.b16 %v181, %v180
    %v200 = vpack.c.b16 %v183, %v182
    %v201 = vpack.c.b16 %v185, %v184
    %v210 = vunpack.c.l.b16 %v107
    %v211 = vunpack.c.l.b16 %v108
    %v212 = vunpack.c.l.b16 %v109
    %v213 = vunpack.c.l.b16 %v110
    %v214 = vunpack.c.l.b16 %v111
    %v215 = vunpack.c.l.b16 %v112
    %v216 = vunpack.c.l.b16 %v113
    %v217 = vunpack.c.l.b16 %v114
    %v218 = vpack.c.b16 %v211, %v210
    %v219 = vpack.c.b16 %v213, %v212
    %v220 = vpack.c.b16 %v215, %v214
    %v221 = vpack.c.b16 %v217, %v216
    %vm226 = vcmask 523264
    %v228 = vsel %vm226, %v186, 0
    %v231 = vsel %vm226, %v187, 0
    %v234 = vsel %vm226, %v188, 0
    %v237 = vsel %vm226, %v189, 0
    %v240 = vsel %vm226, %v190, 0
    %v243 = vsel %vm226, %v191, 0
    %v246 = vsel %vm226, %v192, 0
    %v249 = vsel %vm226, %v193, 0
    %v252 = vsel %vm226, %v194, 0
    %v255 = vsel %vm226, %v195, 0
    %v258 = vsel %vm226, %v196, 0
    %v261 = vsel %vm226, %v197, 0
    %v264 = vsel %vm226, %v198, 0
    %v267 = vsel %vm226, %v199, 0
    %v270 = vsel %vm226, %v200, 0
    %v273 = vsel %vm226, %v201, 0
    %275 = vmatprep.subr.bf16.mxu0 0
    %276 = vmatpush1.bf16.msra.mxu0 %v218
    %277 = vmatprep.subr.bf16.mxu0 0
    %278 = vmatpush1.bf16.msra.mxu0 %v219
    %279 = vmatprep.subr.bf16.mxu0 0
    %280 = vmatpush1.bf16.msra.mxu0 %v220
    %281 = vmatprep.subr.bf16.mxu0 0
    %282 = vmatpush1.bf16.msra.mxu0 %v221
    %283 = vmatprep.subr.bf16.mxu0 0
    %284 = vmatpush1.bf16.msra.mxu0 0
    %285 = vmatprep.subr.bf16.mxu0 0
    %286 = vmatpush1.bf16.msra.mxu0 0
    %287 = vmatprep.subr.bf16.mxu0 0
    %288 = vmatpush1.bf16.msra.mxu0 0
    %289 = vmatprep.subr.bf16.mxu0 0
    %290 = vmatpush1.bf16.msra.mxu0 0
    %291 = vmatprep.subr.bf16.mxu0 0
    %292 = vmatpush1.bf16.msra.mxu0 0
    %293 = vmatprep.subr.bf16.mxu0 0
    %294 = vmatpush1.bf16.msra.mxu0 0
    %295 = vmatprep.subr.bf16.mxu0 0
    %296 = vmatpush1.bf16.msra.mxu0 0
    %297 = vmatprep.subr.bf16.mxu0 0
    %298 = vmatpush1.bf16.msra.mxu0 0
    %299 = vmatprep.subr.bf16.mxu0 0
    %300 = vmatpush1.bf16.msra.mxu0 0
    %301 = vmatprep.subr.bf16.mxu0 0
    %302 = vmatpush1.bf16.msra.mxu0 0
    %303 = vmatprep.subr.bf16.mxu0 0
    %304 = vmatpush1.bf16.msra.mxu0 0
    %305 = vmatprep.subr.bf16.mxu0 0
    %306 = vmatpush1.bf16.msra.mxu0 0
    %307 = vmatprep.mubr.bf16.mxu0 0
    %308 = vmatmul.mubr.bf16.gmra.mrb[0].mxu0 %v228
    %v309 = vpop.f32.mrb[0].mxu0
    %v310 = vadd.f32 %v120, %v309
    %v311 = vpop.f32.mrb[0].mxu0
    %v312 = vpop.f32.mrb[0].mxu0
    %v313 = vadd.f32 %v120, %v312
    %v314 = vpop.f32.mrb[0].mxu0
    %315 = vmatprep.mubr.bf16.mxu0 0
    %316 = vmatmul.mubr.bf16.gmra.mrb[0].mxu0 %v231
    %v317 = vpop.f32.mrb[0].mxu0
    %v318 = vadd.f32 %v120, %v317
    %v319 = vpop.f32.mrb[0].mxu0
    %v320 = vpop.f32.mrb[0].mxu0
    %v321 = vadd.f32 %v120, %v320
    %v322 = vpop.f32.mrb[0].mxu0
    %323 = vmatprep.mubr.bf16.mxu0 0
    %324 = vmatmul.mubr.bf16.gmra.mrb[0].mxu0 %v234
    %v325 = vpop.f32.mrb[0].mxu0
    %v326 = vadd.f32 %v120, %v325
    %v327 = vpop.f32.mrb[0].mxu0
    %v328 = vpop.f32.mrb[0].mxu0
    %v329 = vadd.f32 %v120, %v328
    %v330 = vpop.f32.mrb[0].mxu0
    %331 = vmatprep.mubr.bf16.mxu0 0
    %332 = vmatmul.mubr.bf16.gmra.mrb[0].mxu0 %v237
    %v333 = vpop.f32.mrb[0].mxu0
    %v334 = vadd.f32 %v120, %v333
    %v335 = vpop.f32.mrb[0].mxu0
    %v336 = vpop.f32.mrb[0].mxu0
    %v337 = vadd.f32 %v120, %v336
    %v338 = vpop.f32.mrb[0].mxu0
    %339 = vmatprep.mubr.bf16.mxu0 0
    %340 = vmatmul.mubr.bf16.gmra.mrb[0].mxu0 %v240
    %v341 = vpop.f32.mrb[0].mxu0
    %v342 = vadd.f32 %v120, %v341
    %v343 = vpop.f32.mrb[0].mxu0
    %v344 = vpop.f32.mrb[0].mxu0
    %v345 = vadd.f32 %v120, %v344
    %v346 = vpop.f32.mrb[0].mxu0
    %347 = vmatprep.mubr.bf16.mxu0 0
    %348 = vmatmul.mubr.bf16.gmra.mrb[0].mxu0 %v243
    %v349 = vpop.f32.mrb[0].mxu0
    %v350 = vadd.f32 %v120, %v349
    %v351 = vpop.f32.mrb[0].mxu0
    %v352 = vpop.f32.mrb[0].mxu0
    %v353 = vadd.f32 %v120, %v352
    %v354 = vpop.f32.mrb[0].mxu0
    %355 = vmatprep.mubr.bf16.mxu0 0
    %356 = vmatmul.mubr.bf16.gmra.mrb[0].mxu0 %v246
    %v357 = vpop.f32.mrb[0].mxu0
    %v358 = vadd.f32 %v120, %v357
    %v359 = vpop.f32.mrb[0].mxu0
    %v360 = vpop.f32.mrb[0].mxu0
    %v361 = vadd.f32 %v120, %v360
    %v362 = vpop.f32.mrb[0].mxu0
    %363 = vmatprep.mubr.bf16.mxu0 0
    %364 = vmatmul.mubr.bf16.gmra.mrb[0].mxu0 %v249
    %v365 = vpop.f32.mrb[0].mxu0
    %v366 = vadd.f32 %v120, %v365
    %v367 = vpop.f32.mrb[0].mxu0
    %v368 = vpop.f32.mrb[0].mxu0
    %v369 = vadd.f32 %v120, %v368
    %v370 = vpop.f32.mrb[0].mxu0
    %371 = vmatprep.mubr.bf16.mxu0 0
    %372 = vmatmul.mubr.bf16.gmra.mrb[0].mxu0 %v252
    %v373 = vpop.f32.mrb[0].mxu0
    %v374 = vadd.f32 %v120, %v373
    %v375 = vpop.f32.mrb[0].mxu0
    %v376 = vpop.f32.mrb[0].mxu0
    %v377 = vadd.f32 %v120, %v376
    %v378 = vpop.f32.mrb[0].mxu0
    %379 = vmatprep.mubr.bf16.mxu0 0
    %380 = vmatmul.mubr.bf16.gmra.mrb[0].mxu0 %v255
    %v381 = vpop.f32.mrb[0].mxu0
    %v382 = vadd.f32 %v120, %v381
    %v383 = vpop.f32.mrb[0].mxu0
    %v384 = vpop.f32.mrb[0].mxu0
    %v385 = vadd.f32 %v120, %v384
    %v386 = vpop.f32.mrb[0].mxu0
    %387 = vmatprep.mubr.bf16.mxu0 0
    %388 = vmatmul.mubr.bf16.gmra.mrb[0].mxu0 %v258
    %v389 = vpop.f32.mrb[0].mxu0
    %v390 = vadd.f32 %v120, %v389
    %v391 = vpop.f32.mrb[0].mxu0
    %v392 = vpop.f32.mrb[0].mxu0
    %v393 = vadd.f32 %v120, %v392
    %v394 = vpop.f32.mrb[0].mxu0
    %395 = vmatprep.mubr.bf16.mxu0 0
    %396 = vmatmul.mubr.bf16.gmra.mrb[0].mxu0 %v261
    %v397 = vpop.f32.mrb[0].mxu0
    %v398 = vadd.f32 %v120, %v397
    %v399 = vpop.f32.mrb[0].mxu0
    %v400 = vpop.f32.mrb[0].mxu0
    %v401 = vadd.f32 %v120, %v400
    %v402 = vpop.f32.mrb[0].mxu0
    %403 = vmatprep.mubr.bf16.mxu0 0
    %404 = vmatmul.mubr.bf16.gmra.mrb[0].mxu0 %v264
    %v405 = vpop.f32.mrb[0].mxu0
    %v406 = vadd.f32 %v120, %v405
    %v407 = vpop.f32.mrb[0].mxu0
    %v408 = vpop.f32.mrb[0].mxu0
    %v409 = vadd.f32 %v120, %v408
    %v410 = vpop.f32.mrb[0].mxu0
    %411 = vmatprep.mubr.bf16.mxu0 0
    %412 = vmatmul.mubr.bf16.gmra.mrb[0].mxu0 %v267
    %v413 = vpop.f32.mrb[0].mxu0
    %v414 = vadd.f32 %v120, %v413
    %v415 = vpop.f32.mrb[0].mxu0
    %v416 = vpop.f32.mrb[0].mxu0
    %v417 = vadd.f32 %v120, %v416
    %v418 = vpop.f32.mrb[0].mxu0
    %419 = vmatprep.mubr.bf16.mxu0 0
    %420 = vmatmul.mubr.bf16.gmra.mrb[0].mxu0 %v270
    %v421 = vpop.f32.mrb[0].mxu0
    %v422 = vadd.f32 %v120, %v421
    %v423 = vpop.f32.mrb[0].mxu0
    %v424 = vpop.f32.mrb[0].mxu0
    %v425 = vadd.f32 %v120, %v424
    %v426 = vpop.f32.mrb[0].mxu0
    %427 = vmatprep.mubr.bf16.mxu0 0
    %428 = vmatmul.mubr.bf16.gmra.mrb[0].mxu0 %v273
    %v429 = vpop.f32.mrb[0].mxu0
    %v430 = vadd.f32 %v120, %v429
    %v431 = vpop.f32.mrb[0].mxu0
    %v432 = vpop.f32.mrb[0].mxu0
    %v433 = vadd.f32 %v120, %v432
    %v434 = vpop.f32.mrb[0].mxu0
    %435 = vdwg.mxu0
    %s436 = smul.u32 4, 32
    %s437 = smul.u32 %s436, 2
    %s438 = sshll.u32 %s437, 4
    %439 = dma.done [#allocation3], %s438
    %v440 = vld [vmem:[#allocation2] sm:$0xff]
    %v441 = vld [vmem:[#allocation2 + $0x8] sm:$0xff]
    %v442 = vld [vmem:[#allocation2 + $0x10] sm:$0xff]
    %v443 = vld [vmem:[#allocation2 + $0x18] sm:$0xff]
    %v444 = vld [vmem:[#allocation2 + $0x20] sm:$0xff]
    %v445 = vld [vmem:[#allocation2 + $0x28] sm:$0xff]
    %v446 = vld [vmem:[#allocation2 + $0x30] sm:$0xff]
    %v447 = vld [vmem:[#allocation2 + $0x38] sm:$0xff]
    %v448 = vld [vmem:[#allocation2 + $0x40] sm:$0xff]
    %v449 = vld [vmem:[#allocation2 + $0x48] sm:$0xff]
    %v450 = vld [vmem:[#allocation2 + $0x50] sm:$0xff]
    %v451 = vld [vmem:[#allocation2 + $0x58] sm:$0xff]
    %v452 = vld [vmem:[#allocation2 + $0x60] sm:$0xff]
    %v453 = vld [vmem:[#allocation2 + $0x68] sm:$0xff]
    %v454 = vld [vmem:[#allocation2 + $0x70] sm:$0xff]
    %v455 = vld [vmem:[#allocation2 + $0x78] sm:$0xff]
    %v456 = vld [vmem:[#allocation2 + $0x80] sm:$0xff]
    %v457 = vld [vmem:[#allocation2 + $0x88] sm:$0xff]
    %v458 = vld [vmem:[#allocation2 + $0x90] sm:$0xff]
    %v459 = vld [vmem:[#allocation2 + $0x98] sm:$0xff]
    %v460 = vld [vmem:[#allocation2 + $0xa0] sm:$0xff]
    %v461 = vld [vmem:[#allocation2 + $0xa8] sm:$0xff]
    %v462 = vld [vmem:[#allocation2 + $0xb0] sm:$0xff]
    %v463 = vld [vmem:[#allocation2 + $0xb8] sm:$0xff]
    %v464 = vld [vmem:[#allocation2 + $0xc0] sm:$0xff]
    %v465 = vld [vmem:[#allocation2 + $0xc8] sm:$0xff]
    %v466 = vld [vmem:[#allocation2 + $0xd0] sm:$0xff]
    %v467 = vld [vmem:[#allocation2 + $0xd8] sm:$0xff]
    %v468 = vld [vmem:[#allocation2 + $0xe0] sm:$0xff]
    %v469 = vld [vmem:[#allocation2 + $0xe8] sm:$0xff]
    %v470 = vld [vmem:[#allocation2 + $0xf0] sm:$0xff]
    %v471 = vld [vmem:[#allocation2 + $0xf8] sm:$0xff]
    %v472 = vpack.c.bf16 %v313, %v310
    %v473 = vpack.c.bf16 %v321, %v318
    %v474 = vpack.c.bf16 %v329, %v326
    %v475 = vpack.c.bf16 %v337, %v334
    %v476 = vpack.c.bf16 %v345, %v342
    %v477 = vpack.c.bf16 %v353, %v350
    %v478 = vpack.c.bf16 %v361, %v358
    %v479 = vpack.c.bf16 %v369, %v366
    %v480 = vpack.c.bf16 %v377, %v374
    %v481 = vpack.c.bf16 %v385, %v382
    %v482 = vpack.c.bf16 %v393, %v390
    %v483 = vpack.c.bf16 %v401, %v398
    %v484 = vpack.c.bf16 %v409, %v406
    %v485 = vpack.c.bf16 %v417, %v414
    %v486 = vpack.c.bf16 %v425, %v422
    %v487 = vpack.c.bf16 %v433, %v430
    %488 = vmatprep.subr.bf16.mxu0 0
    %489 = vmatpush1.bf16.msra.mxu0 %v472
    %490 = vmatprep.subr.bf16.mxu0 0
    %491 = vmatpush1.bf16.msra.mxu0 %v473
    %492 = vmatprep.subr.bf16.mxu0 0
    %493 = vmatpush1.bf16.msra.mxu0 %v474
    %494 = vmatprep.subr.bf16.mxu0 0
    %495 = vmatpush1.bf16.msra.mxu0 %v475
    %496 = vmatprep.subr.bf16.mxu0 0
    %497 = vmatpush1.bf16.msra.mxu0 %v476
    %498 = vmatprep.subr.bf16.mxu0 0
    %499 = vmatpush1.bf16.msra.mxu0 %v477
    %500 = vmatprep.subr.bf16.mxu0 0
    %501 = vmatpush1.bf16.msra.mxu0 %v478
    %502 = vmatprep.subr.bf16.mxu0 0
    %503 = vmatpush1.bf16.msra.mxu0 %v479
    %504 = vmatprep.subr.bf16.mxu0 0
    %505 = vmatpush1.bf16.msra.mxu0 %v480
    %506 = vmatprep.subr.bf16.mxu0 0
    %507 = vmatpush1.bf16.msra.mxu0 %v481
    %508 = vmatprep.subr.bf16.mxu0 0
    %509 = vmatpush1.bf16.msra.mxu0 %v482
    %510 = vmatprep.subr.bf16.mxu0 0
    %511 = vmatpush1.bf16.msra.mxu0 %v483
    %512 = vmatprep.subr.bf16.mxu0 0
    %513 = vmatpush1.bf16.msra.mxu0 %v484
    %514 = vmatprep.subr.bf16.mxu0 0
    %515 = vmatpush1.bf16.msra.mxu0 %v485
    %516 = vmatprep.subr.bf16.mxu0 0
    %517 = vmatpush1.bf16.msra.mxu0 %v486
    %518 = vmatprep.subr.bf16.mxu0 0
    %519 = vmatpush1.bf16.msra.mxu0 %v487
    %520 = vmatprep.mubr.bf16.mxu0 %v441
    %521 = vmatmul.mubr.bf16.gmra.mrb[0].mxu0 %v440
    %v522 = vpop.f32.mrb[0].mxu0
    %v523 = vadd.f32 0.0, %v522
    %v524 = vpop.f32.mrb[0].mxu0
    %v525 = vpop.f32.mrb[0].mxu0
    %v526 = vadd.f32 0.0, %v525
    %v527 = vpop.f32.mrb[0].mxu0
    %528 = vmatprep.mubr.bf16.mxu0 %v443
    %529 = vmatmul.mubr.bf16.gmra.mrb[0].mxu0 %v442
    %v530 = vpop.f32.mrb[0].mxu0
    %v531 = vadd.f32 0.0, %v530
    %v532 = vpop.f32.mrb[0].mxu0
    %v533 = vpop.f32.mrb[0].mxu0
    %v534 = vadd.f32 0.0, %v533
    %v535 = vpop.f32.mrb[0].mxu0
    %536 = vmatprep.mubr.bf16.mxu0 %v445
    %537 = vmatmul.mubr.bf16.gmra.mrb[0].mxu0 %v444
    %v538 = vpop.f32.mrb[0].mxu0
    %v539 = vadd.f32 0.0, %v538
    %v540 = vpop.f32.mrb[0].mxu0
    %v541 = vpop.f32.mrb[0].mxu0
    %v542 = vadd.f32 0.0, %v541
    %v543 = vpop.f32.mrb[0].mxu0
    %544 = vmatprep.mubr.bf16.mxu0 %v447
    %545 = vmatmul.mubr.bf16.gmra.mrb[0].mxu0 %v446
    %v546 = vpop.f32.mrb[0].mxu0
    %v547 = vadd.f32 0.0, %v546
    %v548 = vpop.f32.mrb[0].mxu0
    %v549 = vpop.f32.mrb[0].mxu0
    %v550 = vadd.f32 0.0, %v549
    %v551 = vpop.f32.mrb[0].mxu0
    %552 = vmatprep.mubr.bf16.mxu0 %v449
    %553 = vmatmul.mubr.bf16.gmra.mrb[0].mxu0 %v448
    %v554 = vpop.f32.mrb[0].mxu0
    %v555 = vadd.f32 0.0, %v554
    %v556 = vpop.f32.mrb[0].mxu0
    %v557 = vpop.f32.mrb[0].mxu0
    %v558 = vadd.f32 0.0, %v557
    %v559 = vpop.f32.mrb[0].mxu0
    %560 = vmatprep.mubr.bf16.mxu0 %v451
    %561 = vmatmul.mubr.bf16.gmra.mrb[0].mxu0 %v450
    %v562 = vpop.f32.mrb[0].mxu0
    %v563 = vadd.f32 0.0, %v562
    %v564 = vpop.f32.mrb[0].mxu0
    %v565 = vpop.f32.mrb[0].mxu0
    %v566 = vadd.f32 0.0, %v565
    %v567 = vpop.f32.mrb[0].mxu0
    %568 = vmatprep.mubr.bf16.mxu0 %v453
    %569 = vmatmul.mubr.bf16.gmra.mrb[0].mxu0 %v452
    %v570 = vpop.f32.mrb[0].mxu0
    %v571 = vadd.f32 0.0, %v570
    %v572 = vpop.f32.mrb[0].mxu0
    %v573 = vpop.f32.mrb[0].mxu0
    %v574 = vadd.f32 0.0, %v573
    %v575 = vpop.f32.mrb[0].mxu0
    %576 = vmatprep.mubr.bf16.mxu0 %v455
    %577 = vmatmul.mubr.bf16.gmra.mrb[0].mxu0 %v454
    %v578 = vpop.f32.mrb[0].mxu0
    %v579 = vadd.f32 0.0, %v578
    %v580 = vpop.f32.mrb[0].mxu0
    %v581 = vpop.f32.mrb[0].mxu0
    %v582 = vadd.f32 0.0, %v581
    %v583 = vpop.f32.mrb[0].mxu0
    %584 = vmatprep.mubr.bf16.mxu0 %v457
    %585 = vmatmul.mubr.bf16.gmra.mrb[0].mxu0 %v456
    %v586 = vpop.f32.mrb[0].mxu0
    %v587 = vadd.f32 0.0, %v586
    %v588 = vpop.f32.mrb[0].mxu0
    %v589 = vpop.f32.mrb[0].mxu0
    %v590 = vadd.f32 0.0, %v589
    %v591 = vpop.f32.mrb[0].mxu0
    %592 = vmatprep.mubr.bf16.mxu0 %v459
    %593 = vmatmul.mubr.bf16.gmra.mrb[0].mxu0 %v458
    %v594 = vpop.f32.mrb[0].mxu0
    %v595 = vadd.f32 0.0, %v594
    %v596 = vpop.f32.mrb[0].mxu0
    %v597 = vpop.f32.mrb[0].mxu0
    %v598 = vadd.f32 0.0, %v597
    %v599 = vpop.f32.mrb[0].mxu0
    %600 = vmatprep.mubr.bf16.mxu0 %v461
    %601 = vmatmul.mubr.bf16.gmra.mrb[0].mxu0 %v460
    %v602 = vpop.f32.mrb[0].mxu0
    %v603 = vadd.f32 0.0, %v602
    %v604 = vpop.f32.mrb[0].mxu0
    %v605 = vpop.f32.mrb[0].mxu0
    %v606 = vadd.f32 0.0, %v605
    %v607 = vpop.f32.mrb[0].mxu0
    %608 = vmatprep.mubr.bf16.mxu0 %v463
    %609 = vmatmul.mubr.bf16.gmra.mrb[0].mxu0 %v462
    %v610 = vpop.f32.mrb[0].mxu0
    %v611 = vadd.f32 0.0, %v610
    %v612 = vpop.f32.mrb[0].mxu0
    %v613 = vpop.f32.mrb[0].mxu0
    %v614 = vadd.f32 0.0, %v613
    %v615 = vpop.f32.mrb[0].mxu0
    %616 = vmatprep.mubr.bf16.mxu0 %v465
    %617 = vmatmul.mubr.bf16.gmra.mrb[0].mxu0 %v464
    %v618 = vpop.f32.mrb[0].mxu0
    %v619 = vadd.f32 0.0, %v618
    %v620 = vpop.f32.mrb[0].mxu0
    %v621 = vpop.f32.mrb[0].mxu0
    %v622 = vadd.f32 0.0, %v621
    %v623 = vpop.f32.mrb[0].mxu0
    %624 = vmatprep.mubr.bf16.mxu0 %v467
    %625 = vmatmul.mubr.bf16.gmra.mrb[0].mxu0 %v466
    %v626 = vpop.f32.mrb[0].mxu0
    %v627 = vadd.f32 0.0, %v626
    %v628 = vpop.f32.mrb[0].mxu0
    %v629 = vpop.f32.mrb[0].mxu0
    %v630 = vadd.f32 0.0, %v629
    %v631 = vpop.f32.mrb[0].mxu0
    %632 = vmatprep.mubr.bf16.mxu0 %v469
    %633 = vmatmul.mubr.bf16.gmra.mrb[0].mxu0 %v468
    %v634 = vpop.f32.mrb[0].mxu0
    %v635 = vadd.f32 0.0, %v634
    %v636 = vpop.f32.mrb[0].mxu0
    %v637 = vpop.f32.mrb[0].mxu0
    %v638 = vadd.f32 0.0, %v637
    %v639 = vpop.f32.mrb[0].mxu0
    %640 = vmatprep.mubr.bf16.mxu0 %v471
    %641 = vmatmul.mubr.bf16.gmra.mrb[0].mxu0 %v470
    %v642 = vpop.f32.mrb[0].mxu0
    %v643 = vadd.f32 0.0, %v642
    %v644 = vpop.f32.mrb[0].mxu0
    %v645 = vpop.f32.mrb[0].mxu0
    %v646 = vadd.f32 0.0, %v645
    %v647 = vpop.f32.mrb[0].mxu0
    %648 = vdwg.mxu0
    %v649 = vmax.f32 %v523, 0.0
    %v650 = vmax.f32 %v526, 0.0
    %v651 = vmax.f32 %v531, 0.0
    %v652 = vmax.f32 %v534, 0.0
    %v653 = vmax.f32 %v539, 0.0
    %v654 = vmax.f32 %v542, 0.0
    %v655 = vmax.f32 %v547, 0.0
    %v656 = vmax.f32 %v550, 0.0
    %v657 = vmax.f32 %v555, 0.0
    %v658 = vmax.f32 %v558, 0.0
    %v659 = vmax.f32 %v563, 0.0
    %v660 = vmax.f32 %v566, 0.0
    %v661 = vmax.f32 %v571, 0.0
    %v662 = vmax.f32 %v574, 0.0
    %v663 = vmax.f32 %v579, 0.0
    %v664 = vmax.f32 %v582, 0.0
    %v665 = vmax.f32 %v587, 0.0
    %v666 = vmax.f32 %v590, 0.0
    %v667 = vmax.f32 %v595, 0.0
    %v668 = vmax.f32 %v598, 0.0
    %v669 = vmax.f32 %v603, 0.0
    %v670 = vmax.f32 %v606, 0.0
    %v671 = vmax.f32 %v611, 0.0
    %v672 = vmax.f32 %v614, 0.0
    %v673 = vmax.f32 %v619, 0.0
    %v674 = vmax.f32 %v622, 0.0
    %v675 = vmax.f32 %v627, 0.0
    %v676 = vmax.f32 %v630, 0.0
    %v677 = vmax.f32 %v635, 0.0
    %v678 = vmax.f32 %v638, 0.0
    %v679 = vmax.f32 %v643, 0.0
    %v680 = vmax.f32 %v646, 0.0
    %v681 = vpack.c.bf16 %v650, %v649
    %v682 = vpack.c.bf16 %v652, %v651
    %v683 = vpack.c.bf16 %v654, %v653
    %v684 = vpack.c.bf16 %v656, %v655
    %v685 = vpack.c.bf16 %v658, %v657
    %v686 = vpack.c.bf16 %v660, %v659
    %v687 = vpack.c.bf16 %v662, %v661
    %v688 = vpack.c.bf16 %v664, %v663
    %v689 = vpack.c.bf16 %v666, %v665
    %v690 = vpack.c.bf16 %v668, %v667
    %v691 = vpack.c.bf16 %v670, %v669
    %v692 = vpack.c.bf16 %v672, %v671
    %v693 = vpack.c.bf16 %v674, %v673
    %v694 = vpack.c.bf16 %v676, %v675
    %v695 = vpack.c.bf16 %v678, %v677
    %v696 = vpack.c.bf16 %v680, %v679
    %v697 = vld [vmem:[%s3] sm:$0xf]
    %v698 = vld [vmem:[%s3 + $0x4] sm:$0xf]
    %v699 = vld [vmem:[%s3 + $0x8] sm:$0xf]
    %v700 = vld [vmem:[%s3 + $0xc] sm:$0xf]
    %v701 = vld [vmem:[%s3 + $0x10] sm:$0xf]
    %v702 = vld [vmem:[%s3 + $0x14] sm:$0xf]
    %v703 = vld [vmem:[%s3 + $0x18] sm:$0xf]
    %v704 = vld [vmem:[%s3 + $0x1c] sm:$0xf]
    %v705 = vld [vmem:[%s3 + $0x20] sm:$0xf]
    %v706 = vld [vmem:[%s3 + $0x24] sm:$0xf]
    %v707 = vld [vmem:[%s3 + $0x28] sm:$0xf]
    %v708 = vld [vmem:[%s3 + $0x2c] sm:$0xf]
    %v709 = vld [vmem:[%s3 + $0x30] sm:$0xf]
    %v710 = vld [vmem:[%s3 + $0x34] sm:$0xf]
    %v711 = vld [vmem:[%s3 + $0x38] sm:$0xf]
    %v712 = vld [vmem:[%s3 + $0x3c] sm:$0xf]
    %s713 = scalar_lea.vmem %s4, 1
    %v714 = vld [vmem:[%s713] sm:$0x1]
    %v716 = vlaneseq
    %v717 = vshrl.u32 %v716, 7
    %v718 = vsub.s32 0, %v717
    %v719 = vrot.slane %v714, %v718
    %v737 = vunpack.c.l.b16 %v697
    %v738 = vunpack.c.l.b16 %v698
    %v739 = vunpack.c.l.b16 %v699
    %v740 = vunpack.c.l.b16 %v700
    %v741 = vunpack.c.l.b16 %v701
    %v742 = vunpack.c.l.b16 %v702
    %v743 = vunpack.c.l.b16 %v703
    %v744 = vunpack.c.l.b16 %v704
    %v745 = vunpack.c.l.b16 %v705
    %v746 = vunpack.c.l.b16 %v706
    %v747 = vunpack.c.l.b16 %v707
    %v748 = vunpack.c.l.b16 %v708
    %v749 = vunpack.c.l.b16 %v709
    %v750 = vunpack.c.l.b16 %v710
    %v751 = vunpack.c.l.b16 %v711
    %v752 = vunpack.c.l.b16 %v712
    %v753 = vpack.c.b16 %v738, %v737
    %v754 = vpack.c.b16 %v740, %v739
    %v755 = vpack.c.b16 %v742, %v741
    %v756 = vpack.c.b16 %v744, %v743
    %v757 = vpack.c.b16 %v746, %v745
    %v758 = vpack.c.b16 %v748, %v747
    %v759 = vpack.c.b16 %v750, %v749
    %v760 = vpack.c.b16 %v752, %v751
    %769 = vmatprep.subr.bf16.mxu0 0
    %770 = vmatpush1.bf16.msra.mxu0 %v753
    %771 = vmatprep.subr.bf16.mxu0 0
    %772 = vmatpush1.bf16.msra.mxu0 %v754
    %773 = vmatprep.subr.bf16.mxu0 0
    %774 = vmatpush1.bf16.msra.mxu0 %v755
    %775 = vmatprep.subr.bf16.mxu0 0
    %776 = vmatpush1.bf16.msra.mxu0 %v756
    %777 = vmatprep.subr.bf16.mxu0 0
    %778 = vmatpush1.bf16.msra.mxu0 %v757
    %779 = vmatprep.subr.bf16.mxu0 0
    %780 = vmatpush1.bf16.msra.mxu0 %v758
    %781 = vmatprep.subr.bf16.mxu0 0
    %782 = vmatpush1.bf16.msra.mxu0 %v759
    %783 = vmatprep.subr.bf16.mxu0 0
    %784 = vmatpush1.bf16.msra.mxu0 %v760
    %785 = vmatprep.subr.bf16.mxu0 0
    %786 = vmatpush1.bf16.msra.mxu0 0
    %787 = vmatprep.subr.bf16.mxu0 0
    %788 = vmatpush1.bf16.msra.mxu0 0
    %789 = vmatprep.subr.bf16.mxu0 0
    %790 = vmatpush1.bf16.msra.mxu0 0
    %791 = vmatprep.subr.bf16.mxu0 0
    %792 = vmatpush1.bf16.msra.mxu0 0
    %793 = vmatprep.subr.bf16.mxu0 0
    %794 = vmatpush1.bf16.msra.mxu0 0
    %795 = vmatprep.subr.bf16.mxu0 0
    %796 = vmatpush1.bf16.msra.mxu0 0
    %797 = vmatprep.subr.bf16.mxu0 0
    %798 = vmatpush1.bf16.msra.mxu0 0
    %799 = vmatprep.subr.bf16.mxu0 0
    %800 = vmatpush1.bf16.msra.mxu0 0
    %801 = vmatprep.mubr.bf16.mxu0 0
    %802 = vmatmul.mubr.bf16.gmra.mrb[0].mxu0 %v681
    %v803 = vpop.f32.mrb[0].mxu0
    %v804 = vadd.f32 %v719, %v803
    %v805 = vpop.f32.mrb[0].mxu0
    %v806 = vpop.f32.mrb[0].mxu0
    %v807 = vadd.f32 %v719, %v806
    %v808 = vpop.f32.mrb[0].mxu0
    %809 = vmatprep.mubr.bf16.mxu0 0
    %810 = vmatmul.mubr.bf16.gmra.mrb[0].mxu0 %v682
    %v811 = vpop.f32.mrb[0].mxu0
    %v812 = vadd.f32 %v719, %v811
    %v813 = vpop.f32.mrb[0].mxu0
    %v814 = vpop.f32.mrb[0].mxu0
    %v815 = vadd.f32 %v719, %v814
    %v816 = vpop.f32.mrb[0].mxu0
    %817 = vmatprep.mubr.bf16.mxu0 0
    %818 = vmatmul.mubr.bf16.gmra.mrb[0].mxu0 %v683
    %v819 = vpop.f32.mrb[0].mxu0
    %v820 = vadd.f32 %v719, %v819
    %v821 = vpop.f32.mrb[0].mxu0
    %v822 = vpop.f32.mrb[0].mxu0
    %v823 = vadd.f32 %v719, %v822
    %v824 = vpop.f32.mrb[0].mxu0
    %825 = vmatprep.mubr.bf16.mxu0 0
    %826 = vmatmul.mubr.bf16.gmra.mrb[0].mxu0 %v684
    %v827 = vpop.f32.mrb[0].mxu0
    %v828 = vadd.f32 %v719, %v827
    %v829 = vpop.f32.mrb[0].mxu0
    %v830 = vpop.f32.mrb[0].mxu0
    %v831 = vadd.f32 %v719, %v830
    %v832 = vpop.f32.mrb[0].mxu0
    %833 = vmatprep.mubr.bf16.mxu0 0
    %834 = vmatmul.mubr.bf16.gmra.mrb[0].mxu0 %v685
    %v835 = vpop.f32.mrb[0].mxu0
    %v836 = vadd.f32 %v719, %v835
    %v837 = vpop.f32.mrb[0].mxu0
    %v838 = vpop.f32.mrb[0].mxu0
    %v839 = vadd.f32 %v719, %v838
    %v840 = vpop.f32.mrb[0].mxu0
    %841 = vmatprep.mubr.bf16.mxu0 0
    %842 = vmatmul.mubr.bf16.gmra.mrb[0].mxu0 %v686
    %v843 = vpop.f32.mrb[0].mxu0
    %v844 = vadd.f32 %v719, %v843
    %v845 = vpop.f32.mrb[0].mxu0
    %v846 = vpop.f32.mrb[0].mxu0
    %v847 = vadd.f32 %v719, %v846
    %v848 = vpop.f32.mrb[0].mxu0
    %849 = vmatprep.mubr.bf16.mxu0 0
    %850 = vmatmul.mubr.bf16.gmra.mrb[0].mxu0 %v687
    %v851 = vpop.f32.mrb[0].mxu0
    %v852 = vadd.f32 %v719, %v851
    %v853 = vpop.f32.mrb[0].mxu0
    %v854 = vpop.f32.mrb[0].mxu0
    %v855 = vadd.f32 %v719, %v854
    %v856 = vpop.f32.mrb[0].mxu0
    %857 = vmatprep.mubr.bf16.mxu0 0
    %858 = vmatmul.mubr.bf16.gmra.mrb[0].mxu0 %v688
    %v859 = vpop.f32.mrb[0].mxu0
    %v860 = vadd.f32 %v719, %v859
    %v861 = vpop.f32.mrb[0].mxu0
    %v862 = vpop.f32.mrb[0].mxu0
    %v863 = vadd.f32 %v719, %v862
    %v864 = vpop.f32.mrb[0].mxu0
    %865 = vmatprep.mubr.bf16.mxu0 0
    %866 = vmatmul.mubr.bf16.gmra.mrb[0].mxu0 %v689
    %v867 = vpop.f32.mrb[0].mxu0
    %v868 = vadd.f32 %v719, %v867
    %v869 = vpop.f32.mrb[0].mxu0
    %v870 = vpop.f32.mrb[0].mxu0
    %v871 = vadd.f32 %v719, %v870
    %v872 = vpop.f32.mrb[0].mxu0
    %873 = vmatprep.mubr.bf16.mxu0 0
    %874 = vmatmul.mubr.bf16.gmra.mrb[0].mxu0 %v690
    %v875 = vpop.f32.mrb[0].mxu0
    %v876 = vadd.f32 %v719, %v875
    %v877 = vpop.f32.mrb[0].mxu0
    %v878 = vpop.f32.mrb[0].mxu0
    %v879 = vadd.f32 %v719, %v878
    %v880 = vpop.f32.mrb[0].mxu0
    %881 = vmatprep.mubr.bf16.mxu0 0
    %882 = vmatmul.mubr.bf16.gmra.mrb[0].mxu0 %v691
    %v883 = vpop.f32.mrb[0].mxu0
    %v884 = vadd.f32 %v719, %v883
    %v885 = vpop.f32.mrb[0].mxu0
    %v886 = vpop.f32.mrb[0].mxu0
    %v887 = vadd.f32 %v719, %v886
    %v888 = vpop.f32.mrb[0].mxu0
    %889 = vmatprep.mubr.bf16.mxu0 0
    %890 = vmatmul.mubr.bf16.gmra.mrb[0].mxu0 %v692
    %v891 = vpop.f32.mrb[0].mxu0
    %v892 = vadd.f32 %v719, %v891
    %v893 = vpop.f32.mrb[0].mxu0
    %v894 = vpop.f32.mrb[0].mxu0
    %v895 = vadd.f32 %v719, %v894
    %v896 = vpop.f32.mrb[0].mxu0
    %897 = vmatprep.mubr.bf16.mxu0 0
    %898 = vmatmul.mubr.bf16.gmra.mrb[0].mxu0 %v693
    %v899 = vpop.f32.mrb[0].mxu0
    %v900 = vadd.f32 %v719, %v899
    %v901 = vpop.f32.mrb[0].mxu0
    %v902 = vpop.f32.mrb[0].mxu0
    %v903 = vadd.f32 %v719, %v902
    %v904 = vpop.f32.mrb[0].mxu0
    %905 = vmatprep.mubr.bf16.mxu0 0
    %906 = vmatmul.mubr.bf16.gmra.mrb[0].mxu0 %v694
    %v907 = vpop.f32.mrb[0].mxu0
    %v908 = vadd.f32 %v719, %v907
    %v909 = vpop.f32.mrb[0].mxu0
    %v910 = vpop.f32.mrb[0].mxu0
    %v911 = vadd.f32 %v719, %v910
    %v912 = vpop.f32.mrb[0].mxu0
    %913 = vmatprep.mubr.bf16.mxu0 0
    %914 = vmatmul.mubr.bf16.gmra.mrb[0].mxu0 %v695
    %v915 = vpop.f32.mrb[0].mxu0
    %v916 = vadd.f32 %v719, %v915
    %v917 = vpop.f32.mrb[0].mxu0
    %v918 = vpop.f32.mrb[0].mxu0
    %v919 = vadd.f32 %v719, %v918
    %v920 = vpop.f32.mrb[0].mxu0
    %921 = vmatprep.mubr.bf16.mxu0 0
    %922 = vmatmul.mubr.bf16.gmra.mrb[0].mxu0 %v696
    %v923 = vpop.f32.mrb[0].mxu0
    %v924 = vadd.f32 %v719, %v923
    %v925 = vpop.f32.mrb[0].mxu0
    %v926 = vpop.f32.mrb[0].mxu0
    %v927 = vadd.f32 %v719, %v926
    %v928 = vpop.f32.mrb[0].mxu0
    %929 = vdwg.mxu0
    %v930 = vpack.c.bf16 %v807, %v804
    %v931 = vpack.c.bf16 %v815, %v812
    %v932 = vpack.c.bf16 %v823, %v820
    %v933 = vpack.c.bf16 %v831, %v828
    %v934 = vpack.c.bf16 %v839, %v836
    %v935 = vpack.c.bf16 %v847, %v844
    %v936 = vpack.c.bf16 %v855, %v852
    %v937 = vpack.c.bf16 %v863, %v860
    %v938 = vpack.c.bf16 %v871, %v868
    %v939 = vpack.c.bf16 %v879, %v876
    %v940 = vpack.c.bf16 %v887, %v884
    %v941 = vpack.c.bf16 %v895, %v892
    %v942 = vpack.c.bf16 %v903, %v900
    %v943 = vpack.c.bf16 %v911, %v908
    %v944 = vpack.c.bf16 %v919, %v916
    %v945 = vpack.c.bf16 %v927, %v924
    %946 = vmatprep.subr.bf16.mxu0 0
    %947 = vmatpush1.bf16.msra.mxu0 %v930
    %948 = vmatprep.subr.bf16.mxu0 0
    %949 = vmatpush1.bf16.msra.mxu0 %v931
    %950 = vmatprep.subr.bf16.mxu0 0
    %951 = vmatpush1.bf16.msra.mxu0 %v932
    %952 = vmatprep.subr.bf16.mxu0 0
    %953 = vmatpush1.bf16.msra.mxu0 %v933
    %954 = vmatprep.subr.bf16.mxu0 0
    %955 = vmatpush1.bf16.msra.mxu0 %v934
    %956 = vmatprep.subr.bf16.mxu0 0
    %957 = vmatpush1.bf16.msra.mxu0 %v935
    %958 = vmatprep.subr.bf16.mxu0 0
    %959 = vmatpush1.bf16.msra.mxu0 %v936
    %960 = vmatprep.subr.bf16.mxu0 0
    %961 = vmatpush1.bf16.msra.mxu0 %v937
    %962 = vmatprep.subr.bf16.mxu0 0
    %963 = vmatpush1.bf16.msra.mxu0 %v938
    %964 = vmatprep.subr.bf16.mxu0 0
    %965 = vmatpush1.bf16.msra.mxu0 %v939
    %966 = vmatprep.subr.bf16.mxu0 0
    %967 = vmatpush1.bf16.msra.mxu0 %v940
    %968 = vmatprep.subr.bf16.mxu0 0
    %969 = vmatpush1.bf16.msra.mxu0 %v941
    %970 = vmatprep.subr.bf16.mxu0 0
    %971 = vmatpush1.bf16.msra.mxu0 %v942
    %972 = vmatprep.subr.bf16.mxu0 0
    %973 = vmatpush1.bf16.msra.mxu0 %v943
    %974 = vmatprep.subr.bf16.mxu0 0
    %975 = vmatpush1.bf16.msra.mxu0 %v944
    %976 = vmatprep.subr.bf16.mxu0 0
    %977 = vmatpush1.bf16.msra.mxu0 %v945
    %978 = vmatprep.mubr.bf16.mxu0 %v441
    %979 = vmatmul.mubr.bf16.gmra.mrb[0].mxu0 %v440
    %v980 = vpop.f32.mrb[0].mxu0
    %v981 = vadd.f32 0.0, %v980
    %v982 = vpop.f32.mrb[0].mxu0
    %v983 = vpop.f32.mrb[0].mxu0
    %v984 = vadd.f32 0.0, %v983
    %v985 = vpop.f32.mrb[0].mxu0
    %986 = vmatprep.mubr.bf16.mxu0 %v443
    %987 = vmatmul.mubr.bf16.gmra.mrb[0].mxu0 %v442
    %v988 = vpop.f32.mrb[0].mxu0
    %v989 = vadd.f32 0.0, %v988
    %v990 = vpop.f32.mrb[0].mxu0
    %v991 = vpop.f32.mrb[0].mxu0
    %v992 = vadd.f32 0.0, %v991
    %v993 = vpop.f32.mrb[0].mxu0
    %994 = vmatprep.mubr.bf16.mxu0 %v445
    %995 = vmatmul.mubr.bf16.gmra.mrb[0].mxu0 %v444
    %v996 = vpop.f32.mrb[0].mxu0
    %v997 = vadd.f32 0.0, %v996
    %v998 = vpop.f32.mrb[0].mxu0
    %v999 = vpop.f32.mrb[0].mxu0
    %v1000 = vadd.f32 0.0, %v999
    %v1001 = vpop.f32.mrb[0].mxu0
    %1002 = vmatprep.mubr.bf16.mxu0 %v447
    %1003 = vmatmul.mubr.bf16.gmra.mrb[0].mxu0 %v446
    %v1004 = vpop.f32.mrb[0].mxu0
    %v1005 = vadd.f32 0.0, %v1004
    %v1006 = vpop.f32.mrb[0].mxu0
    %v1007 = vpop.f32.mrb[0].mxu0
    %v1008 = vadd.f32 0.0, %v1007
    %v1009 = vpop.f32.mrb[0].mxu0
    %1010 = vmatprep.mubr.bf16.mxu0 %v449
    %1011 = vmatmul.mubr.bf16.gmra.mrb[0].mxu0 %v448
    %v1012 = vpop.f32.mrb[0].mxu0
    %v1013 = vadd.f32 0.0, %v1012
    %v1014 = vpop.f32.mrb[0].mxu0
    %v1015 = vpop.f32.mrb[0].mxu0
    %v1016 = vadd.f32 0.0, %v1015
    %v1017 = vpop.f32.mrb[0].mxu0
    %1018 = vmatprep.mubr.bf16.mxu0 %v451
    %1019 = vmatmul.mubr.bf16.gmra.mrb[0].mxu0 %v450
    %v1020 = vpop.f32.mrb[0].mxu0
    %v1021 = vadd.f32 0.0, %v1020
    %v1022 = vpop.f32.mrb[0].mxu0
    %v1023 = vpop.f32.mrb[0].mxu0
    %v1024 = vadd.f32 0.0, %v1023
    %v1025 = vpop.f32.mrb[0].mxu0
    %1026 = vmatprep.mubr.bf16.mxu0 %v453
    %1027 = vmatmul.mubr.bf16.gmra.mrb[0].mxu0 %v452
    %v1028 = vpop.f32.mrb[0].mxu0
    %v1029 = vadd.f32 0.0, %v1028
    %v1030 = vpop.f32.mrb[0].mxu0
    %v1031 = vpop.f32.mrb[0].mxu0
    %v1032 = vadd.f32 0.0, %v1031
    %v1033 = vpop.f32.mrb[0].mxu0
    %1034 = vmatprep.mubr.bf16.mxu0 %v455
    %1035 = vmatmul.mubr.bf16.gmra.mrb[0].mxu0 %v454
    %v1036 = vpop.f32.mrb[0].mxu0
    %v1037 = vadd.f32 0.0, %v1036
    %v1038 = vpop.f32.mrb[0].mxu0
    %v1039 = vpop.f32.mrb[0].mxu0
    %v1040 = vadd.f32 0.0, %v1039
    %v1041 = vpop.f32.mrb[0].mxu0
    %1042 = vmatprep.mubr.bf16.mxu0 %v457
    %1043 = vmatmul.mubr.bf16.gmra.mrb[0].mxu0 %v456
    %v1044 = vpop.f32.mrb[0].mxu0
    %v1045 = vadd.f32 0.0, %v1044
    %v1046 = vpop.f32.mrb[0].mxu0
    %v1047 = vpop.f32.mrb[0].mxu0
    %v1048 = vadd.f32 0.0, %v1047
    %v1049 = vpop.f32.mrb[0].mxu0
    %1050 = vmatprep.mubr.bf16.mxu0 %v459
    %1051 = vmatmul.mubr.bf16.gmra.mrb[0].mxu0 %v458
    %v1052 = vpop.f32.mrb[0].mxu0
    %v1053 = vadd.f32 0.0, %v1052
    %v1054 = vpop.f32.mrb[0].mxu0
    %v1055 = vpop.f32.mrb[0].mxu0
    %v1056 = vadd.f32 0.0, %v1055
    %v1057 = vpop.f32.mrb[0].mxu0
    %1058 = vmatprep.mubr.bf16.mxu0 %v461
    %1059 = vmatmul.mubr.bf16.gmra.mrb[0].mxu0 %v460
    %v1060 = vpop.f32.mrb[0].mxu0
    %v1061 = vadd.f32 0.0, %v1060
    %v1062 = vpop.f32.mrb[0].mxu0
    %v1063 = vpop.f32.mrb[0].mxu0
    %v1064 = vadd.f32 0.0, %v1063
    %v1065 = vpop.f32.mrb[0].mxu0
    %1066 = vmatprep.mubr.bf16.mxu0 %v463
    %1067 = vmatmul.mubr.bf16.gmra.mrb[0].mxu0 %v462
    %v1068 = vpop.f32.mrb[0].mxu0
    %v1069 = vadd.f32 0.0, %v1068
    %v1070 = vpop.f32.mrb[0].mxu0
    %v1071 = vpop.f32.mrb[0].mxu0
    %v1072 = vadd.f32 0.0, %v1071
    %v1073 = vpop.f32.mrb[0].mxu0
    %1074 = vmatprep.mubr.bf16.mxu0 %v465
    %1075 = vmatmul.mubr.bf16.gmra.mrb[0].mxu0 %v464
    %v1076 = vpop.f32.mrb[0].mxu0
    %v1077 = vadd.f32 0.0, %v1076
    %v1078 = vpop.f32.mrb[0].mxu0
    %v1079 = vpop.f32.mrb[0].mxu0
    %v1080 = vadd.f32 0.0, %v1079
    %v1081 = vpop.f32.mrb[0].mxu0
    %1082 = vmatprep.mubr.bf16.mxu0 %v467
    %1083 = vmatmul.mubr.bf16.gmra.mrb[0].mxu0 %v466
    %v1084 = vpop.f32.mrb[0].mxu0
    %v1085 = vadd.f32 0.0, %v1084
    %v1086 = vpop.f32.mrb[0].mxu0
    %v1087 = vpop.f32.mrb[0].mxu0
    %v1088 = vadd.f32 0.0, %v1087
    %v1089 = vpop.f32.mrb[0].mxu0
    %1090 = vmatprep.mubr.bf16.mxu0 %v469
    %1091 = vmatmul.mubr.bf16.gmra.mrb[0].mxu0 %v468
    %v1092 = vpop.f32.mrb[0].mxu0
    %v1093 = vadd.f32 0.0, %v1092
    %v1094 = vpop.f32.mrb[0].mxu0
    %v1095 = vpop.f32.mrb[0].mxu0
    %v1096 = vadd.f32 0.0, %v1095
    %v1097 = vpop.f32.mrb[0].mxu0
    %1098 = vmatprep.mubr.bf16.mxu0 %v471
    %1099 = vmatmul.mubr.bf16.gmra.mrb[0].mxu0 %v470
    %v1100 = vpop.f32.mrb[0].mxu0
    %v1101 = vadd.f32 0.0, %v1100
    %v1102 = vpop.f32.mrb[0].mxu0
    %v1103 = vpop.f32.mrb[0].mxu0
    %v1104 = vadd.f32 0.0, %v1103
    %v1105 = vpop.f32.mrb[0].mxu0
    %1106 = vdwg.mxu0
    %v1107 = vmax.f32 %v981, 0.0
    %v1108 = vmax.f32 %v984, 0.0
    %v1109 = vmax.f32 %v989, 0.0
    %v1110 = vmax.f32 %v992, 0.0
    %v1111 = vmax.f32 %v997, 0.0
    %v1112 = vmax.f32 %v1000, 0.0
    %v1113 = vmax.f32 %v1005, 0.0
    %v1114 = vmax.f32 %v1008, 0.0
    %v1115 = vmax.f32 %v1013, 0.0
    %v1116 = vmax.f32 %v1016, 0.0
    %v1117 = vmax.f32 %v1021, 0.0
    %v1118 = vmax.f32 %v1024, 0.0
    %v1119 = vmax.f32 %v1029, 0.0
    %v1120 = vmax.f32 %v1032, 0.0
    %v1121 = vmax.f32 %v1037, 0.0
    %v1122 = vmax.f32 %v1040, 0.0
    %v1123 = vmax.f32 %v1045, 0.0
    %v1124 = vmax.f32 %v1048, 0.0
    %v1125 = vmax.f32 %v1053, 0.0
    %v1126 = vmax.f32 %v1056, 0.0
    %v1127 = vmax.f32 %v1061, 0.0
    %v1128 = vmax.f32 %v1064, 0.0
    %v1129 = vmax.f32 %v1069, 0.0
    %v1130 = vmax.f32 %v1072, 0.0
    %v1131 = vmax.f32 %v1077, 0.0
    %v1132 = vmax.f32 %v1080, 0.0
    %v1133 = vmax.f32 %v1085, 0.0
    %v1134 = vmax.f32 %v1088, 0.0
    %v1135 = vmax.f32 %v1093, 0.0
    %v1136 = vmax.f32 %v1096, 0.0
    %v1137 = vmax.f32 %v1101, 0.0
    %v1138 = vmax.f32 %v1104, 0.0
    %v1139 = vadd.f32 %v1107, %v649
    %v1140 = vadd.f32 %v1108, %v650
    %v1141 = vadd.f32 %v1109, %v651
    %v1142 = vadd.f32 %v1110, %v652
    %v1143 = vadd.f32 %v1111, %v653
    %v1144 = vadd.f32 %v1112, %v654
    %v1145 = vadd.f32 %v1113, %v655
    %v1146 = vadd.f32 %v1114, %v656
    %v1147 = vadd.f32 %v1115, %v657
    %v1148 = vadd.f32 %v1116, %v658
    %v1149 = vadd.f32 %v1117, %v659
    %v1150 = vadd.f32 %v1118, %v660
    %v1151 = vadd.f32 %v1119, %v661
    %v1152 = vadd.f32 %v1120, %v662
    %v1153 = vadd.f32 %v1121, %v663
    %v1154 = vadd.f32 %v1122, %v664
    %v1155 = vadd.f32 %v1123, %v665
    %v1156 = vadd.f32 %v1124, %v666
    %v1157 = vadd.f32 %v1125, %v667
    %v1158 = vadd.f32 %v1126, %v668
    %v1159 = vadd.f32 %v1127, %v669
    %v1160 = vadd.f32 %v1128, %v670
    %v1161 = vadd.f32 %v1129, %v671
    %v1162 = vadd.f32 %v1130, %v672
    %v1163 = vadd.f32 %v1131, %v673
    %v1164 = vadd.f32 %v1132, %v674
    %v1165 = vadd.f32 %v1133, %v675
    %v1166 = vadd.f32 %v1134, %v676
    %v1167 = vadd.f32 %v1135, %v677
    %v1168 = vadd.f32 %v1136, %v678
    %v1169 = vadd.f32 %v1137, %v679
    %v1170 = vadd.f32 %v1138, %v680
    %v1171 = vpack.c.bf16 %v1140, %v1139
    %v1172 = vpack.c.bf16 %v1142, %v1141
    %v1173 = vpack.c.bf16 %v1144, %v1143
    %v1174 = vpack.c.bf16 %v1146, %v1145
    %v1175 = vpack.c.bf16 %v1148, %v1147
    %v1176 = vpack.c.bf16 %v1150, %v1149
    %v1177 = vpack.c.bf16 %v1152, %v1151
    %v1178 = vpack.c.bf16 %v1154, %v1153
    %v1179 = vpack.c.bf16 %v1156, %v1155
    %v1180 = vpack.c.bf16 %v1158, %v1157
    %v1181 = vpack.c.bf16 %v1160, %v1159
    %v1182 = vpack.c.bf16 %v1162, %v1161
    %v1183 = vpack.c.bf16 %v1164, %v1163
    %v1184 = vpack.c.bf16 %v1166, %v1165
    %v1185 = vpack.c.bf16 %v1168, %v1167
    %v1186 = vpack.c.bf16 %v1170, %v1169
    %s1187 = scalar_lea.vmem %s3, 64
    %v1188 = vld [vmem:[%s1187] sm:$0xf]
    %v1189 = vld [vmem:[%s1187 + $0x4] sm:$0xf]
    %v1190 = vld [vmem:[%s1187 + $0x8] sm:$0xf]
    %v1191 = vld [vmem:[%s1187 + $0xc] sm:$0xf]
    %v1192 = vld [vmem:[%s1187 + $0x10] sm:$0xf]
    %v1193 = vld [vmem:[%s1187 + $0x14] sm:$0xf]
    %v1194 = vld [vmem:[%s1187 + $0x18] sm:$0xf]
    %v1195 = vld [vmem:[%s1187 + $0x1c] sm:$0xf]
    %v1196 = vld [vmem:[%s1187 + $0x20] sm:$0xf]
    %v1197 = vld [vmem:[%s1187 + $0x24] sm:$0xf]
    %v1198 = vld [vmem:[%s1187 + $0x28] sm:$0xf]
    %v1199 = vld [vmem:[%s1187 + $0x2c] sm:$0xf]
    %v1200 = vld [vmem:[%s1187 + $0x30] sm:$0xf]
    %v1201 = vld [vmem:[%s1187 + $0x34] sm:$0xf]
    %v1202 = vld [vmem:[%s1187 + $0x38] sm:$0xf]
    %v1203 = vld [vmem:[%s1187 + $0x3c] sm:$0xf]
    %s1204 = scalar_lea.vmem %s4, 2
    %v1205 = vld [vmem:[%s1204] sm:$0x1]
    %v1207 = vlaneseq
    %v1208 = vshrl.u32 %v1207, 7
    %v1209 = vsub.s32 0, %v1208
    %v1210 = vrot.slane %v1205, %v1209
    %v1228 = vunpack.c.l.b16 %v1188
    %v1229 = vunpack.c.l.b16 %v1189
    %v1230 = vunpack.c.l.b16 %v1190
    %v1231 = vunpack.c.l.b16 %v1191
    %v1232 = vunpack.c.l.b16 %v1192
    %v1233 = vunpack.c.l.b16 %v1193
    %v1234 = vunpack.c.l.b16 %v1194
    %v1235 = vunpack.c.l.b16 %v1195
    %v1236 = vunpack.c.l.b16 %v1196
    %v1237 = vunpack.c.l.b16 %v1197
    %v1238 = vunpack.c.l.b16 %v1198
    %v1239 = vunpack.c.l.b16 %v1199
    %v1240 = vunpack.c.l.b16 %v1200
    %v1241 = vunpack.c.l.b16 %v1201
    %v1242 = vunpack.c.l.b16 %v1202
    %v1243 = vunpack.c.l.b16 %v1203
    %v1244 = vpack.c.b16 %v1229, %v1228
    %v1245 = vpack.c.b16 %v1231, %v1230
    %v1246 = vpack.c.b16 %v1233, %v1232
    %v1247 = vpack.c.b16 %v1235, %v1234
    %v1248 = vpack.c.b16 %v1237, %v1236
    %v1249 = vpack.c.b16 %v1239, %v1238
    %v1250 = vpack.c.b16 %v1241, %v1240
    %v1251 = vpack.c.b16 %v1243, %v1242
    %1260 = vmatprep.subr.bf16.mxu0 0
    %1261 = vmatpush1.bf16.msra.mxu0 %v1244
    %1262 = vmatprep.subr.bf16.mxu0 0
    %1263 = vmatpush1.bf16.msra.mxu0 %v1245
    %1264 = vmatprep.subr.bf16.mxu0 0
    %1265 = vmatpush1.bf16.msra.mxu0 %v1246
    %1266 = vmatprep.subr.bf16.mxu0 0
    %1267 = vmatpush1.bf16.msra.mxu0 %v1247
    %1268 = vmatprep.subr.bf16.mxu0 0
    %1269 = vmatpush1.bf16.msra.mxu0 %v1248
    %1270 = vmatprep.subr.bf16.mxu0 0
    %1271 = vmatpush1.bf16.msra.mxu0 %v1249
    %1272 = vmatprep.subr.bf16.mxu0 0
    %1273 = vmatpush1.bf16.msra.mxu0 %v1250
    %1274 = vmatprep.subr.bf16.mxu0 0
    %1275 = vmatpush1.bf16.msra.mxu0 %v1251
    %1276 = vmatprep.subr.bf16.mxu0 0
    %1277 = vmatpush1.bf16.msra.mxu0 0
    %1278 = vmatprep.subr.bf16.mxu0 0
    %1279 = vmatpush1.bf16.msra.mxu0 0
    %1280 = vmatprep.subr.bf16.mxu0 0
    %1281 = vmatpush1.bf16.msra.mxu0 0
    %1282 = vmatprep.subr.bf16.mxu0 0
    %1283 = vmatpush1.bf16.msra.mxu0 0
    %1284 = vmatprep.subr.bf16.mxu0 0
    %1285 = vmatpush1.bf16.msra.mxu0 0
    %1286 = vmatprep.subr.bf16.mxu0 0
    %1287 = vmatpush1.bf16.msra.mxu0 0
    %1288 = vmatprep.subr.bf16.mxu0 0
    %1289 = vmatpush1.bf16.msra.mxu0 0
    %1290 = vmatprep.subr.bf16.mxu0 0
    %1291 = vmatpush1.bf16.msra.mxu0 0
    %1292 = vmatprep.mubr.bf16.mxu0 0
    %1293 = vmatmul.mubr.bf16.gmra.mrb[0].mxu0 %v1171
    %v1294 = vpop.f32.mrb[0].mxu0
    %v1295 = vadd.f32 %v1210, %v1294
    %v1296 = vpop.f32.mrb[0].mxu0
    %v1297 = vpop.f32.mrb[0].mxu0
    %v1298 = vadd.f32 %v1210, %v1297
    %v1299 = vpop.f32.mrb[0].mxu0
    %1300 = vmatprep.mubr.bf16.mxu0 0
    %1301 = vmatmul.mubr.bf16.gmra.mrb[0].mxu0 %v1172
    %v1302 = vpop.f32.mrb[0].mxu0
    %v1303 = vadd.f32 %v1210, %v1302
    %v1304 = vpop.f32.mrb[0].mxu0
    %v1305 = vpop.f32.mrb[0].mxu0
    %v1306 = vadd.f32 %v1210, %v1305
    %v1307 = vpop.f32.mrb[0].mxu0
    %1308 = vmatprep.mubr.bf16.mxu0 0
    %1309 = vmatmul.mubr.bf16.gmra.mrb[0].mxu0 %v1173
    %v1310 = vpop.f32.mrb[0].mxu0
    %v1311 = vadd.f32 %v1210, %v1310
    %v1312 = vpop.f32.mrb[0].mxu0
    %v1313 = vpop.f32.mrb[0].mxu0
    %v1314 = vadd.f32 %v1210, %v1313
    %v1315 = vpop.f32.mrb[0].mxu0
    %1316 = vmatprep.mubr.bf16.mxu0 0
    %1317 = vmatmul.mubr.bf16.gmra.mrb[0].mxu0 %v1174
    %v1318 = vpop.f32.mrb[0].mxu0
    %v1319 = vadd.f32 %v1210, %v1318
    %v1320 = vpop.f32.mrb[0].mxu0
    %v1321 = vpop.f32.mrb[0].mxu0
    %v1322 = vadd.f32 %v1210, %v1321
    %v1323 = vpop.f32.mrb[0].mxu0
    %1324 = vmatprep.mubr.bf16.mxu0 0
    %1325 = vmatmul.mubr.bf16.gmra.mrb[0].mxu0 %v1175
    %v1326 = vpop.f32.mrb[0].mxu0
    %v1327 = vadd.f32 %v1210, %v1326
    %v1328 = vpop.f32.mrb[0].mxu0
    %v1329 = vpop.f32.mrb[0].mxu0
    %v1330 = vadd.f32 %v1210, %v1329
    %v1331 = vpop.f32.mrb[0].mxu0
    %1332 = vmatprep.mubr.bf16.mxu0 0
    %1333 = vmatmul.mubr.bf16.gmra.mrb[0].mxu0 %v1176
    %v1334 = vpop.f32.mrb[0].mxu0
    %v1335 = vadd.f32 %v1210, %v1334
    %v1336 = vpop.f32.mrb[0].mxu0
    %v1337 = vpop.f32.mrb[0].mxu0
    %v1338 = vadd.f32 %v1210, %v1337
    %v1339 = vpop.f32.mrb[0].mxu0
    %1340 = vmatprep.mubr.bf16.mxu0 0
    %1341 = vmatmul.mubr.bf16.gmra.mrb[0].mxu0 %v1177
    %v1342 = vpop.f32.mrb[0].mxu0
    %v1343 = vadd.f32 %v1210, %v1342
    %v1344 = vpop.f32.mrb[0].mxu0
    %v1345 = vpop.f32.mrb[0].mxu0
    %v1346 = vadd.f32 %v1210, %v1345
    %v1347 = vpop.f32.mrb[0].mxu0
    %1348 = vmatprep.mubr.bf16.mxu0 0
    %1349 = vmatmul.mubr.bf16.gmra.mrb[0].mxu0 %v1178
    %v1350 = vpop.f32.mrb[0].mxu0
    %v1351 = vadd.f32 %v1210, %v1350
    %v1352 = vpop.f32.mrb[0].mxu0
    %v1353 = vpop.f32.mrb[0].mxu0
    %v1354 = vadd.f32 %v1210, %v1353
    %v1355 = vpop.f32.mrb[0].mxu0
    %1356 = vmatprep.mubr.bf16.mxu0 0
    %1357 = vmatmul.mubr.bf16.gmra.mrb[0].mxu0 %v1179
    %v1358 = vpop.f32.mrb[0].mxu0
    %v1359 = vadd.f32 %v1210, %v1358
    %v1360 = vpop.f32.mrb[0].mxu0
    %v1361 = vpop.f32.mrb[0].mxu0
    %v1362 = vadd.f32 %v1210, %v1361
    %v1363 = vpop.f32.mrb[0].mxu0
    %1364 = vmatprep.mubr.bf16.mxu0 0
    %1365 = vmatmul.mubr.bf16.gmra.mrb[0].mxu0 %v1180
    %v1366 = vpop.f32.mrb[0].mxu0
    %v1367 = vadd.f32 %v1210, %v1366
    %v1368 = vpop.f32.mrb[0].mxu0
    %v1369 = vpop.f32.mrb[0].mxu0
    %v1370 = vadd.f32 %v1210, %v1369
    %v1371 = vpop.f32.mrb[0].mxu0
    %1372 = vmatprep.mubr.bf16.mxu0 0
    %1373 = vmatmul.mubr.bf16.gmra.mrb[0].mxu0 %v1181
    %v1374 = vpop.f32.mrb[0].mxu0
    %v1375 = vadd.f32 %v1210, %v1374
    %v1376 = vpop.f32.mrb[0].mxu0
    %v1377 = vpop.f32.mrb[0].mxu0
    %v1378 = vadd.f32 %v1210, %v1377
    %v1379 = vpop.f32.mrb[0].mxu0
    %1380 = vmatprep.mubr.bf16.mxu0 0
    %1381 = vmatmul.mubr.bf16.gmra.mrb[0].mxu0 %v1182
    %v1382 = vpop.f32.mrb[0].mxu0
    %v1383 = vadd.f32 %v1210, %v1382
    %v1384 = vpop.f32.mrb[0].mxu0
    %v1385 = vpop.f32.mrb[0].mxu0
    %v1386 = vadd.f32 %v1210, %v1385
    %v1387 = vpop.f32.mrb[0].mxu0
    %1388 = vmatprep.mubr.bf16.mxu0 0
    %1389 = vmatmul.mubr.bf16.gmra.mrb[0].mxu0 %v1183
    %v1390 = vpop.f32.mrb[0].mxu0
    %v1391 = vadd.f32 %v1210, %v1390
    %v1392 = vpop.f32.mrb[0].mxu0
    %v1393 = vpop.f32.mrb[0].mxu0
    %v1394 = vadd.f32 %v1210, %v1393
    %v1395 = vpop.f32.mrb[0].mxu0
    %1396 = vmatprep.mubr.bf16.mxu0 0
    %1397 = vmatmul.mubr.bf16.gmra.mrb[0].mxu0 %v1184
    %v1398 = vpop.f32.mrb[0].mxu0
    %v1399 = vadd.f32 %v1210, %v1398
    %v1400 = vpop.f32.mrb[0].mxu0
    %v1401 = vpop.f32.mrb[0].mxu0
    %v1402 = vadd.f32 %v1210, %v1401
    %v1403 = vpop.f32.mrb[0].mxu0
    %1404 = vmatprep.mubr.bf16.mxu0 0
    %1405 = vmatmul.mubr.bf16.gmra.mrb[0].mxu0 %v1185
    %v1406 = vpop.f32.mrb[0].mxu0
    %v1407 = vadd.f32 %v1210, %v1406
    %v1408 = vpop.f32.mrb[0].mxu0
    %v1409 = vpop.f32.mrb[0].mxu0
    %v1410 = vadd.f32 %v1210, %v1409
    %v1411 = vpop.f32.mrb[0].mxu0
    %1412 = vmatprep.mubr.bf16.mxu0 0
    %1413 = vmatmul.mubr.bf16.gmra.mrb[0].mxu0 %v1186
    %v1414 = vpop.f32.mrb[0].mxu0
    %v1415 = vadd.f32 %v1210, %v1414
    %v1416 = vpop.f32.mrb[0].mxu0
    %v1417 = vpop.f32.mrb[0].mxu0
    %v1418 = vadd.f32 %v1210, %v1417
    %v1419 = vpop.f32.mrb[0].mxu0
    %1420 = vdwg.mxu0
    %v1421 = vpack.c.bf16 %v1298, %v1295
    %v1422 = vpack.c.bf16 %v1306, %v1303
    %v1423 = vpack.c.bf16 %v1314, %v1311
    %v1424 = vpack.c.bf16 %v1322, %v1319
    %v1425 = vpack.c.bf16 %v1330, %v1327
    %v1426 = vpack.c.bf16 %v1338, %v1335
    %v1427 = vpack.c.bf16 %v1346, %v1343
    %v1428 = vpack.c.bf16 %v1354, %v1351
    %v1429 = vpack.c.bf16 %v1362, %v1359
    %v1430 = vpack.c.bf16 %v1370, %v1367
    %v1431 = vpack.c.bf16 %v1378, %v1375
    %v1432 = vpack.c.bf16 %v1386, %v1383
    %v1433 = vpack.c.bf16 %v1394, %v1391
    %v1434 = vpack.c.bf16 %v1402, %v1399
    %v1435 = vpack.c.bf16 %v1410, %v1407
    %v1436 = vpack.c.bf16 %v1418, %v1415
    %1437 = vmatprep.subr.bf16.mxu0 0
    %1438 = vmatpush1.bf16.msra.mxu0 %v1421
    %1439 = vmatprep.subr.bf16.mxu0 0
    %1440 = vmatpush1.bf16.msra.mxu0 %v1422
    %1441 = vmatprep.subr.bf16.mxu0 0
    %1442 = vmatpush1.bf16.msra.mxu0 %v1423
    %1443 = vmatprep.subr.bf16.mxu0 0
    %1444 = vmatpush1.bf16.msra.mxu0 %v1424
    %1445 = vmatprep.subr.bf16.mxu0 0
    %1446 = vmatpush1.bf16.msra.mxu0 %v1425
    %1447 = vmatprep.subr.bf16.mxu0 0
    %1448 = vmatpush1.bf16.msra.mxu0 %v1426
    %1449 = vmatprep.subr.bf16.mxu0 0
    %1450 = vmatpush1.bf16.msra.mxu0 %v1427
    %1451 = vmatprep.subr.bf16.mxu0 0
    %1452 = vmatpush1.bf16.msra.mxu0 %v1428
    %1453 = vmatprep.subr.bf16.mxu0 0
    %1454 = vmatpush1.bf16.msra.mxu0 %v1429
    %1455 = vmatprep.subr.bf16.mxu0 0
    %1456 = vmatpush1.bf16.msra.mxu0 %v1430
    %1457 = vmatprep.subr.bf16.mxu0 0
    %1458 = vmatpush1.bf16.msra.mxu0 %v1431
    %1459 = vmatprep.subr.bf16.mxu0 0
    %1460 = vmatpush1.bf16.msra.mxu0 %v1432
    %1461 = vmatprep.subr.bf16.mxu0 0
    %1462 = vmatpush1.bf16.msra.mxu0 %v1433
    %1463 = vmatprep.subr.bf16.mxu0 0
    %1464 = vmatpush1.bf16.msra.mxu0 %v1434
    %1465 = vmatprep.subr.bf16.mxu0 0
    %1466 = vmatpush1.bf16.msra.mxu0 %v1435
    %1467 = vmatprep.subr.bf16.mxu0 0
    %1468 = vmatpush1.bf16.msra.mxu0 %v1436
    %1469 = vmatprep.mubr.bf16.mxu0 %v441
    %1470 = vmatmul.mubr.bf16.gmra.mrb[0].mxu0 %v440
    %v1471 = vpop.f32.mrb[0].mxu0
    %v1472 = vadd.f32 0.0, %v1471
    %v1473 = vpop.f32.mrb[0].mxu0
    %v1474 = vpop.f32.mrb[0].mxu0
    %v1475 = vadd.f32 0.0, %v1474
    %v1476 = vpop.f32.mrb[0].mxu0
    %1477 = vmatprep.mubr.bf16.mxu0 %v443
    %1478 = vmatmul.mubr.bf16.gmra.mrb[0].mxu0 %v442
    %v1479 = vpop.f32.mrb[0].mxu0
    %v1480 = vadd.f32 0.0, %v1479
    %v1481 = vpop.f32.mrb[0].mxu0
    %v1482 = vpop.f32.mrb[0].mxu0
    %v1483 = vadd.f32 0.0, %v1482
    %v1484 = vpop.f32.mrb[0].mxu0
    %1485 = vmatprep.mubr.bf16.mxu0 %v445
    %1486 = vmatmul.mubr.bf16.gmra.mrb[0].mxu0 %v444
    %v1487 = vpop.f32.mrb[0].mxu0
    %v1488 = vadd.f32 0.0, %v1487
    %v1489 = vpop.f32.mrb[0].mxu0
    %v1490 = vpop.f32.mrb[0].mxu0
    %v1491 = vadd.f32 0.0, %v1490
    %v1492 = vpop.f32.mrb[0].mxu0
    %1493 = vmatprep.mubr.bf16.mxu0 %v447
    %1494 = vmatmul.mubr.bf16.gmra.mrb[0].mxu0 %v446
    %v1495 = vpop.f32.mrb[0].mxu0
    %v1496 = vadd.f32 0.0, %v1495
    %v1497 = vpop.f32.mrb[0].mxu0
    %v1498 = vpop.f32.mrb[0].mxu0
    %v1499 = vadd.f32 0.0, %v1498
    %v1500 = vpop.f32.mrb[0].mxu0
    %1501 = vmatprep.mubr.bf16.mxu0 %v449
    %1502 = vmatmul.mubr.bf16.gmra.mrb[0].mxu0 %v448
    %v1503 = vpop.f32.mrb[0].mxu0
    %v1504 = vadd.f32 0.0, %v1503
    %v1505 = vpop.f32.mrb[0].mxu0
    %v1506 = vpop.f32.mrb[0].mxu0
    %v1507 = vadd.f32 0.0, %v1506
    %v1508 = vpop.f32.mrb[0].mxu0
    %1509 = vmatprep.mubr.bf16.mxu0 %v451
    %1510 = vmatmul.mubr.bf16.gmra.mrb[0].mxu0 %v450
    %v1511 = vpop.f32.mrb[0].mxu0
    %v1512 = vadd.f32 0.0, %v1511
    %v1513 = vpop.f32.mrb[0].mxu0
    %v1514 = vpop.f32.mrb[0].mxu0
    %v1515 = vadd.f32 0.0, %v1514
    %v1516 = vpop.f32.mrb[0].mxu0
    %1517 = vmatprep.mubr.bf16.mxu0 %v453
    %1518 = vmatmul.mubr.bf16.gmra.mrb[0].mxu0 %v452
    %v1519 = vpop.f32.mrb[0].mxu0
    %v1520 = vadd.f32 0.0, %v1519
    %v1521 = vpop.f32.mrb[0].mxu0
    %v1522 = vpop.f32.mrb[0].mxu0
    %v1523 = vadd.f32 0.0, %v1522
    %v1524 = vpop.f32.mrb[0].mxu0
    %1525 = vmatprep.mubr.bf16.mxu0 %v455
    %1526 = vmatmul.mubr.bf16.gmra.mrb[0].mxu0 %v454
    %v1527 = vpop.f32.mrb[0].mxu0
    %v1528 = vadd.f32 0.0, %v1527
    %v1529 = vpop.f32.mrb[0].mxu0
    %v1530 = vpop.f32.mrb[0].mxu0
    %v1531 = vadd.f32 0.0, %v1530
    %v1532 = vpop.f32.mrb[0].mxu0
    %1533 = vmatprep.mubr.bf16.mxu0 %v457
    %1534 = vmatmul.mubr.bf16.gmra.mrb[0].mxu0 %v456
    %v1535 = vpop.f32.mrb[0].mxu0
    %v1536 = vadd.f32 0.0, %v1535
    %v1537 = vpop.f32.mrb[0].mxu0
    %v1538 = vpop.f32.mrb[0].mxu0
    %v1539 = vadd.f32 0.0, %v1538
    %v1540 = vpop.f32.mrb[0].mxu0
    %1541 = vmatprep.mubr.bf16.mxu0 %v459
    %1542 = vmatmul.mubr.bf16.gmra.mrb[0].mxu0 %v458
    %v1543 = vpop.f32.mrb[0].mxu0
    %v1544 = vadd.f32 0.0, %v1543
    %v1545 = vpop.f32.mrb[0].mxu0
    %v1546 = vpop.f32.mrb[0].mxu0
    %v1547 = vadd.f32 0.0, %v1546
    %v1548 = vpop.f32.mrb[0].mxu0
    %1549 = vmatprep.mubr.bf16.mxu0 %v461
    %1550 = vmatmul.mubr.bf16.gmra.mrb[0].mxu0 %v460
    %v1551 = vpop.f32.mrb[0].mxu0
    %v1552 = vadd.f32 0.0, %v1551
    %v1553 = vpop.f32.mrb[0].mxu0
    %v1554 = vpop.f32.mrb[0].mxu0
    %v1555 = vadd.f32 0.0, %v1554
    %v1556 = vpop.f32.mrb[0].mxu0
    %1557 = vmatprep.mubr.bf16.mxu0 %v463
    %1558 = vmatmul.mubr.bf16.gmra.mrb[0].mxu0 %v462
    %v1559 = vpop.f32.mrb[0].mxu0
    %v1560 = vadd.f32 0.0, %v1559
    %v1561 = vpop.f32.mrb[0].mxu0
    %v1562 = vpop.f32.mrb[0].mxu0
    %v1563 = vadd.f32 0.0, %v1562
    %v1564 = vpop.f32.mrb[0].mxu0
    %1565 = vmatprep.mubr.bf16.mxu0 %v465
    %1566 = vmatmul.mubr.bf16.gmra.mrb[0].mxu0 %v464
    %v1567 = vpop.f32.mrb[0].mxu0
    %v1568 = vadd.f32 0.0, %v1567
    %v1569 = vpop.f32.mrb[0].mxu0
    %v1570 = vpop.f32.mrb[0].mxu0
    %v1571 = vadd.f32 0.0, %v1570
    %v1572 = vpop.f32.mrb[0].mxu0
    %1573 = vmatprep.mubr.bf16.mxu0 %v467
    %1574 = vmatmul.mubr.bf16.gmra.mrb[0].mxu0 %v466
    %v1575 = vpop.f32.mrb[0].mxu0
    %v1576 = vadd.f32 0.0, %v1575
    %v1577 = vpop.f32.mrb[0].mxu0
    %v1578 = vpop.f32.mrb[0].mxu0
    %v1579 = vadd.f32 0.0, %v1578
    %v1580 = vpop.f32.mrb[0].mxu0
    %1581 = vmatprep.mubr.bf16.mxu0 %v469
    %1582 = vmatmul.mubr.bf16.gmra.mrb[0].mxu0 %v468
    %v1583 = vpop.f32.mrb[0].mxu0
    %v1584 = vadd.f32 0.0, %v1583
    %v1585 = vpop.f32.mrb[0].mxu0
    %v1586 = vpop.f32.mrb[0].mxu0
    %v1587 = vadd.f32 0.0, %v1586
    %v1588 = vpop.f32.mrb[0].mxu0
    %1589 = vmatprep.mubr.bf16.mxu0 %v471
    %1590 = vmatmul.mubr.bf16.gmra.mrb[0].mxu0 %v470
    %v1591 = vpop.f32.mrb[0].mxu0
    %v1592 = vadd.f32 0.0, %v1591
    %v1593 = vpop.f32.mrb[0].mxu0
    %v1594 = vpop.f32.mrb[0].mxu0
    %v1595 = vadd.f32 0.0, %v1594
    %v1596 = vpop.f32.mrb[0].mxu0
    %1597 = vdwg.mxu0
    %v1598 = vmax.f32 %v1472, 0.0
    %v1599 = vmax.f32 %v1475, 0.0
    %v1600 = vmax.f32 %v1480, 0.0
    %v1601 = vmax.f32 %v1483, 0.0
    %v1602 = vmax.f32 %v1488, 0.0
    %v1603 = vmax.f32 %v1491, 0.0
    %v1604 = vmax.f32 %v1496, 0.0
    %v1605 = vmax.f32 %v1499, 0.0
    %v1606 = vmax.f32 %v1504, 0.0
    %v1607 = vmax.f32 %v1507, 0.0
    %v1608 = vmax.f32 %v1512, 0.0
    %v1609 = vmax.f32 %v1515, 0.0
    %v1610 = vmax.f32 %v1520, 0.0
    %v1611 = vmax.f32 %v1523, 0.0
    %v1612 = vmax.f32 %v1528, 0.0
    %v1613 = vmax.f32 %v1531, 0.0
    %v1614 = vmax.f32 %v1536, 0.0
    %v1615 = vmax.f32 %v1539, 0.0
    %v1616 = vmax.f32 %v1544, 0.0
    %v1617 = vmax.f32 %v1547, 0.0
    %v1618 = vmax.f32 %v1552, 0.0
    %v1619 = vmax.f32 %v1555, 0.0
    %v1620 = vmax.f32 %v1560, 0.0
    %v1621 = vmax.f32 %v1563, 0.0
    %v1622 = vmax.f32 %v1568, 0.0
    %v1623 = vmax.f32 %v1571, 0.0
    %v1624 = vmax.f32 %v1576, 0.0
    %v1625 = vmax.f32 %v1579, 0.0
    %v1626 = vmax.f32 %v1584, 0.0
    %v1627 = vmax.f32 %v1587, 0.0
    %v1628 = vmax.f32 %v1592, 0.0
    %v1629 = vmax.f32 %v1595, 0.0
    %v1630 = vadd.f32 %v1598, %v1139
    %v1631 = vadd.f32 %v1599, %v1140
    %v1632 = vadd.f32 %v1600, %v1141
    %v1633 = vadd.f32 %v1601, %v1142
    %v1634 = vadd.f32 %v1602, %v1143
    %v1635 = vadd.f32 %v1603, %v1144
    %v1636 = vadd.f32 %v1604, %v1145
    %v1637 = vadd.f32 %v1605, %v1146
    %v1638 = vadd.f32 %v1606, %v1147
    %v1639 = vadd.f32 %v1607, %v1148
    %v1640 = vadd.f32 %v1608, %v1149
    %v1641 = vadd.f32 %v1609, %v1150
    %v1642 = vadd.f32 %v1610, %v1151
    %v1643 = vadd.f32 %v1611, %v1152
    %v1644 = vadd.f32 %v1612, %v1153
    %v1645 = vadd.f32 %v1613, %v1154
    %v1646 = vadd.f32 %v1614, %v1155
    %v1647 = vadd.f32 %v1615, %v1156
    %v1648 = vadd.f32 %v1616, %v1157
    %v1649 = vadd.f32 %v1617, %v1158
    %v1650 = vadd.f32 %v1618, %v1159
    %v1651 = vadd.f32 %v1619, %v1160
    %v1652 = vadd.f32 %v1620, %v1161
    %v1653 = vadd.f32 %v1621, %v1162
    %v1654 = vadd.f32 %v1622, %v1163
    %v1655 = vadd.f32 %v1623, %v1164
    %v1656 = vadd.f32 %v1624, %v1165
    %v1657 = vadd.f32 %v1625, %v1166
    %v1658 = vadd.f32 %v1626, %v1167
    %v1659 = vadd.f32 %v1627, %v1168
    %v1660 = vadd.f32 %v1628, %v1169
    %v1661 = vadd.f32 %v1629, %v1170
    %v1662 = vpack.c.bf16 %v1631, %v1630
    %v1663 = vpack.c.bf16 %v1633, %v1632
    %v1664 = vpack.c.bf16 %v1635, %v1634
    %v1665 = vpack.c.bf16 %v1637, %v1636
    %v1666 = vpack.c.bf16 %v1639, %v1638
    %v1667 = vpack.c.bf16 %v1641, %v1640
    %v1668 = vpack.c.bf16 %v1643, %v1642
    %v1669 = vpack.c.bf16 %v1645, %v1644
    %v1670 = vpack.c.bf16 %v1647, %v1646
    %v1671 = vpack.c.bf16 %v1649, %v1648
    %v1672 = vpack.c.bf16 %v1651, %v1650
    %v1673 = vpack.c.bf16 %v1653, %v1652
    %v1674 = vpack.c.bf16 %v1655, %v1654
    %v1675 = vpack.c.bf16 %v1657, %v1656
    %v1676 = vpack.c.bf16 %v1659, %v1658
    %v1677 = vpack.c.bf16 %v1661, %v1660
    %v1678 = vld [vmem:[%s5] sm:$0xf]
    %v1679 = vld [vmem:[%s5 + $0x4] sm:$0xf]
    %v1680 = vld [vmem:[%s5 + $0x8] sm:$0xf]
    %v1681 = vld [vmem:[%s5 + $0xc] sm:$0xf]
    %v1682 = vld [vmem:[%s5 + $0x10] sm:$0xf]
    %v1683 = vld [vmem:[%s5 + $0x14] sm:$0xf]
    %v1684 = vld [vmem:[%s5 + $0x18] sm:$0xf]
    %v1685 = vld [vmem:[%s5 + $0x1c] sm:$0xf]
    %v1686 = vld [vmem:[%s5 + $0x20] sm:$0xf]
    %v1687 = vld [vmem:[%s5 + $0x24] sm:$0xf]
    %v1688 = vld [vmem:[%s5 + $0x28] sm:$0xf]
    %v1689 = vld [vmem:[%s5 + $0x2c] sm:$0xf]
    %v1690 = vld [vmem:[%s5 + $0x30] sm:$0xf]
    %v1691 = vld [vmem:[%s5 + $0x34] sm:$0xf]
    %v1692 = vld [vmem:[%s5 + $0x38] sm:$0xf]
    %v1693 = vld [vmem:[%s5 + $0x3c] sm:$0xf]
    %v1694 = vld [vmem:[%s6] sm:$0x1]
    %v1696 = vlaneseq
    %v1697 = vshrl.u32 %v1696, 7
    %v1698 = vsub.s32 0, %v1697
    %v1699 = vrot.slane %v1694, %v1698
    %v1717 = vunpack.c.l.b16 %v1678
    %v1718 = vunpack.c.l.b16 %v1679
    %v1719 = vunpack.c.l.b16 %v1680
    %v1720 = vunpack.c.l.b16 %v1681
    %v1721 = vunpack.c.l.b16 %v1682
    %v1722 = vunpack.c.l.b16 %v1683
    %v1723 = vunpack.c.l.b16 %v1684
    %v1724 = vunpack.c.l.b16 %v1685
    %v1725 = vunpack.c.l.b16 %v1686
    %v1726 = vunpack.c.l.b16 %v1687
    %v1727 = vunpack.c.l.b16 %v1688
    %v1728 = vunpack.c.l.b16 %v1689
    %v1729 = vunpack.c.l.b16 %v1690
    %v1730 = vunpack.c.l.b16 %v1691
    %v1731 = vunpack.c.l.b16 %v1692
    %v1732 = vunpack.c.l.b16 %v1693
    %v1733 = vpack.c.b16 %v1718, %v1717
    %v1734 = vpack.c.b16 %v1720, %v1719
    %v1735 = vpack.c.b16 %v1722, %v1721
    %v1736 = vpack.c.b16 %v1724, %v1723
    %v1737 = vpack.c.b16 %v1726, %v1725
    %v1738 = vpack.c.b16 %v1728, %v1727
    %v1739 = vpack.c.b16 %v1730, %v1729
    %v1740 = vpack.c.b16 %v1732, %v1731
    %1749 = vmatprep.subr.bf16.mxu0 0
    %1750 = vmatpush1.bf16.msra.mxu0 %v1733
    %1751 = vmatprep.subr.bf16.mxu0 0
    %1752 = vmatpush1.bf16.msra.mxu0 %v1734
    %1753 = vmatprep.subr.bf16.mxu0 0
    %1754 = vmatpush1.bf16.msra.mxu0 %v1735
    %1755 = vmatprep.subr.bf16.mxu0 0
    %1756 = vmatpush1.bf16.msra.mxu0 %v1736
    %1757 = vmatprep.subr.bf16.mxu0 0
    %1758 = vmatpush1.bf16.msra.mxu0 %v1737
    %1759 = vmatprep.subr.bf16.mxu0 0
    %1760 = vmatpush1.bf16.msra.mxu0 %v1738
    %1761 = vmatprep.subr.bf16.mxu0 0
    %1762 = vmatpush1.bf16.msra.mxu0 %v1739
    %1763 = vmatprep.subr.bf16.mxu0 0
    %1764 = vmatpush1.bf16.msra.mxu0 %v1740
    %1765 = vmatprep.subr.bf16.mxu0 0
    %1766 = vmatpush1.bf16.msra.mxu0 0
    %1767 = vmatprep.subr.bf16.mxu0 0
    %1768 = vmatpush1.bf16.msra.mxu0 0
    %1769 = vmatprep.subr.bf16.mxu0 0
    %1770 = vmatpush1.bf16.msra.mxu0 0
    %1771 = vmatprep.subr.bf16.mxu0 0
    %1772 = vmatpush1.bf16.msra.mxu0 0
    %1773 = vmatprep.subr.bf16.mxu0 0
    %1774 = vmatpush1.bf16.msra.mxu0 0
    %1775 = vmatprep.subr.bf16.mxu0 0
    %1776 = vmatpush1.bf16.msra.mxu0 0
    %1777 = vmatprep.subr.bf16.mxu0 0
    %1778 = vmatpush1.bf16.msra.mxu0 0
    %1779 = vmatprep.subr.bf16.mxu0 0
    %1780 = vmatpush1.bf16.msra.mxu0 0
    %1781 = vmatprep.mubr.bf16.mxu0 0
    %1782 = vmatmul.mubr.bf16.gmra.mrb[0].mxu0 %v1662
    %v1783 = vpop.f32.mrb[0].mxu0
    %v1784 = vadd.f32 %v1699, %v1783
    %v1785 = vpop.f32.mrb[0].mxu0
    %v1786 = vpop.f32.mrb[0].mxu0
    %v1787 = vadd.f32 %v1699, %v1786
    %v1788 = vpop.f32.mrb[0].mxu0
    %1789 = vmatprep.mubr.bf16.mxu0 0
    %1790 = vmatmul.mubr.bf16.gmra.mrb[0].mxu0 %v1663
    %v1791 = vpop.f32.mrb[0].mxu0
    %v1792 = vadd.f32 %v1699, %v1791
    %v1793 = vpop.f32.mrb[0].mxu0
    %v1794 = vpop.f32.mrb[0].mxu0
    %v1795 = vadd.f32 %v1699, %v1794
    %v1796 = vpop.f32.mrb[0].mxu0
    %1797 = vmatprep.mubr.bf16.mxu0 0
    %1798 = vmatmul.mubr.bf16.gmra.mrb[0].mxu0 %v1664
    %v1799 = vpop.f32.mrb[0].mxu0
    %v1800 = vadd.f32 %v1699, %v1799
    %v1801 = vpop.f32.mrb[0].mxu0
    %v1802 = vpop.f32.mrb[0].mxu0
    %v1803 = vadd.f32 %v1699, %v1802
    %v1804 = vpop.f32.mrb[0].mxu0
    %1805 = vmatprep.mubr.bf16.mxu0 0
    %1806 = vmatmul.mubr.bf16.gmra.mrb[0].mxu0 %v1665
    %v1807 = vpop.f32.mrb[0].mxu0
    %v1808 = vadd.f32 %v1699, %v1807
    %v1809 = vpop.f32.mrb[0].mxu0
    %v1810 = vpop.f32.mrb[0].mxu0
    %v1811 = vadd.f32 %v1699, %v1810
    %v1812 = vpop.f32.mrb[0].mxu0
    %1813 = vmatprep.mubr.bf16.mxu0 0
    %1814 = vmatmul.mubr.bf16.gmra.mrb[0].mxu0 %v1666
    %v1815 = vpop.f32.mrb[0].mxu0
    %v1816 = vadd.f32 %v1699, %v1815
    %v1817 = vpop.f32.mrb[0].mxu0
    %v1818 = vpop.f32.mrb[0].mxu0
    %v1819 = vadd.f32 %v1699, %v1818
    %v1820 = vpop.f32.mrb[0].mxu0
    %1821 = vmatprep.mubr.bf16.mxu0 0
    %1822 = vmatmul.mubr.bf16.gmra.mrb[0].mxu0 %v1667
    %v1823 = vpop.f32.mrb[0].mxu0
    %v1824 = vadd.f32 %v1699, %v1823
    %v1825 = vpop.f32.mrb[0].mxu0
    %v1826 = vpop.f32.mrb[0].mxu0
    %v1827 = vadd.f32 %v1699, %v1826
    %v1828 = vpop.f32.mrb[0].mxu0
    %1829 = vmatprep.mubr.bf16.mxu0 0
    %1830 = vmatmul.mubr.bf16.gmra.mrb[0].mxu0 %v1668
    %v1831 = vpop.f32.mrb[0].mxu0
    %v1832 = vadd.f32 %v1699, %v1831
    %v1833 = vpop.f32.mrb[0].mxu0
    %v1834 = vpop.f32.mrb[0].mxu0
    %v1835 = vadd.f32 %v1699, %v1834
    %v1836 = vpop.f32.mrb[0].mxu0
    %1837 = vmatprep.mubr.bf16.mxu0 0
    %1838 = vmatmul.mubr.bf16.gmra.mrb[0].mxu0 %v1669
    %v1839 = vpop.f32.mrb[0].mxu0
    %v1840 = vadd.f32 %v1699, %v1839
    %v1841 = vpop.f32.mrb[0].mxu0
    %v1842 = vpop.f32.mrb[0].mxu0
    %v1843 = vadd.f32 %v1699, %v1842
    %v1844 = vpop.f32.mrb[0].mxu0
    %1845 = vmatprep.mubr.bf16.mxu0 0
    %1846 = vmatmul.mubr.bf16.gmra.mrb[0].mxu0 %v1670
    %v1847 = vpop.f32.mrb[0].mxu0
    %v1848 = vadd.f32 %v1699, %v1847
    %v1849 = vpop.f32.mrb[0].mxu0
    %v1850 = vpop.f32.mrb[0].mxu0
    %v1851 = vadd.f32 %v1699, %v1850
    %v1852 = vpop.f32.mrb[0].mxu0
    %1853 = vmatprep.mubr.bf16.mxu0 0
    %1854 = vmatmul.mubr.bf16.gmra.mrb[0].mxu0 %v1671
    %v1855 = vpop.f32.mrb[0].mxu0
    %v1856 = vadd.f32 %v1699, %v1855
    %v1857 = vpop.f32.mrb[0].mxu0
    %v1858 = vpop.f32.mrb[0].mxu0
    %v1859 = vadd.f32 %v1699, %v1858
    %v1860 = vpop.f32.mrb[0].mxu0
    %1861 = vmatprep.mubr.bf16.mxu0 0
    %1862 = vmatmul.mubr.bf16.gmra.mrb[0].mxu0 %v1672
    %v1863 = vpop.f32.mrb[0].mxu0
    %v1864 = vadd.f32 %v1699, %v1863
    %v1865 = vpop.f32.mrb[0].mxu0
    %v1866 = vpop.f32.mrb[0].mxu0
    %v1867 = vadd.f32 %v1699, %v1866
    %v1868 = vpop.f32.mrb[0].mxu0
    %1869 = vmatprep.mubr.bf16.mxu0 0
    %1870 = vmatmul.mubr.bf16.gmra.mrb[0].mxu0 %v1673
    %v1871 = vpop.f32.mrb[0].mxu0
    %v1872 = vadd.f32 %v1699, %v1871
    %v1873 = vpop.f32.mrb[0].mxu0
    %v1874 = vpop.f32.mrb[0].mxu0
    %v1875 = vadd.f32 %v1699, %v1874
    %v1876 = vpop.f32.mrb[0].mxu0
    %1877 = vmatprep.mubr.bf16.mxu0 0
    %1878 = vmatmul.mubr.bf16.gmra.mrb[0].mxu0 %v1674
    %v1879 = vpop.f32.mrb[0].mxu0
    %v1880 = vadd.f32 %v1699, %v1879
    %v1881 = vpop.f32.mrb[0].mxu0
    %v1882 = vpop.f32.mrb[0].mxu0
    %v1883 = vadd.f32 %v1699, %v1882
    %v1884 = vpop.f32.mrb[0].mxu0
    %1885 = vmatprep.mubr.bf16.mxu0 0
    %1886 = vmatmul.mubr.bf16.gmra.mrb[0].mxu0 %v1675
    %v1887 = vpop.f32.mrb[0].mxu0
    %v1888 = vadd.f32 %v1699, %v1887
    %v1889 = vpop.f32.mrb[0].mxu0
    %v1890 = vpop.f32.mrb[0].mxu0
    %v1891 = vadd.f32 %v1699, %v1890
    %v1892 = vpop.f32.mrb[0].mxu0
    %1893 = vmatprep.mubr.bf16.mxu0 0
    %1894 = vmatmul.mubr.bf16.gmra.mrb[0].mxu0 %v1676
    %v1895 = vpop.f32.mrb[0].mxu0
    %v1896 = vadd.f32 %v1699, %v1895
    %v1897 = vpop.f32.mrb[0].mxu0
    %v1898 = vpop.f32.mrb[0].mxu0
    %v1899 = vadd.f32 %v1699, %v1898
    %v1900 = vpop.f32.mrb[0].mxu0
    %1901 = vmatprep.mubr.bf16.mxu0 0
    %1902 = vmatmul.mubr.bf16.gmra.mrb[0].mxu0 %v1677
    %v1903 = vpop.f32.mrb[0].mxu0
    %v1904 = vadd.f32 %v1699, %v1903
    %v1905 = vpop.f32.mrb[0].mxu0
    %v1906 = vpop.f32.mrb[0].mxu0
    %v1907 = vadd.f32 %v1699, %v1906
    %v1908 = vpop.f32.mrb[0].mxu0
    %1909 = vdwg.mxu0
    %1910 = vst [vmem:[#allocation7] sm:$0xff] %v1784
    %1911 = vst [vmem:[#allocation7 + $0x8] sm:$0xff] %v1787
    %1912 = vst [vmem:[#allocation7 + $0x10] sm:$0xff] %v1792
    %1913 = vst [vmem:[#allocation7 + $0x18] sm:$0xff] %v1795
    %1914 = vst [vmem:[#allocation7 + $0x20] sm:$0xff] %v1800
    %1915 = vst [vmem:[#allocation7 + $0x28] sm:$0xff] %v1803
    %1916 = vst [vmem:[#allocation7 + $0x30] sm:$0xff] %v1808
    %1917 = vst [vmem:[#allocation7 + $0x38] sm:$0xff] %v1811
    %1918 = vst [vmem:[#allocation7 + $0x40] sm:$0xff] %v1816
    %1919 = vst [vmem:[#allocation7 + $0x48] sm:$0xff] %v1819
    %1920 = vst [vmem:[#allocation7 + $0x50] sm:$0xff] %v1824
    %1921 = vst [vmem:[#allocation7 + $0x58] sm:$0xff] %v1827
    %1922 = vst [vmem:[#allocation7 + $0x60] sm:$0xff] %v1832
    %1923 = vst [vmem:[#allocation7 + $0x68] sm:$0xff] %v1835
    %1924 = vst [vmem:[#allocation7 + $0x70] sm:$0xff] %v1840
    %1925 = vst [vmem:[#allocation7 + $0x78] sm:$0xff] %v1843
    %1926 = vst [vmem:[#allocation7 + $0x80] sm:$0xff] %v1848
    %1927 = vst [vmem:[#allocation7 + $0x88] sm:$0xff] %v1851
    %1928 = vst [vmem:[#allocation7 + $0x90] sm:$0xff] %v1856
    %1929 = vst [vmem:[#allocation7 + $0x98] sm:$0xff] %v1859
    %1930 = vst [vmem:[#allocation7 + $0xa0] sm:$0xff] %v1864
    %1931 = vst [vmem:[#allocation7 + $0xa8] sm:$0xff] %v1867
    %1932 = vst [vmem:[#allocation7 + $0xb0] sm:$0xff] %v1872
    %1933 = vst [vmem:[#allocation7 + $0xb8] sm:$0xff] %v1875
    %1934 = vst [vmem:[#allocation7 + $0xc0] sm:$0xff] %v1880
    %1935 = vst [vmem:[#allocation7 + $0xc8] sm:$0xff] %v1883
    %1936 = vst [vmem:[#allocation7 + $0xd0] sm:$0xff] %v1888
    %1937 = vst [vmem:[#allocation7 + $0xd8] sm:$0xff] %v1891
    %1938 = vst [vmem:[#allocation7 + $0xe0] sm:$0xff] %v1896
    %1939 = vst [vmem:[#allocation7 + $0xe8] sm:$0xff] %v1899
    %1940 = vst [vmem:[#allocation7 + $0xf0] sm:$0xff] %v1904
    %1941 = vst [vmem:[#allocation7 + $0xf8] sm:$0xff] %v1907
    // Predicated region
    $region30: #{tpu_custom_call.1} parent=1 // pred_check
      _
    $region31: #{tpu_custom_call.1} parent=1 // pred_check_branch
      %1943 = sbr.rel (0) target = $region33
    $region32: #{tpu_custom_call.1} parent=1 // pred_region
      %s1945 = ssub.s32 4096, 4096
      %1946 = vsyncadd [#allocation6], %s1945
      %s1947 = sshll.u32 [#allocation7], 4
      %s1948 = int_to_ptr.vmem [resolvable:$true] %s1947
      %1953 = dma.vmem_to_hbm [thread:$0]  %s1948, 4096, %s7, [#allocation6], 128, 128, 8
    $region33: #{tpu_custom_call.1} parent=1 // pred_fallthru
      _
    // Predicated region
    $region34: #{tpu_custom_call.1} parent=1 // pred_check
      _
    $region35: #{tpu_custom_call.1} parent=1 // pred_check_branch
      %1955 = sbr.rel (0) target = $region37
    $region36: #{tpu_custom_call.1} parent=1 // pred_region
      %1956 = dma.done [#allocation6], 4096
    $region37: #{tpu_custom_call.1} parent=1 // pred_fallthru
      _
    %1957 = vsyncpa [#allocation5], 1
    %1958 = vsyncpa [#allocation6], 1
  %1959 = vsyncmov [#allocation3]
  %s1960 = vpop.sfrf %1959
  %p1961 = scmp.eq.s32.totalorder %s1960, 0
  %p1962 = pneg %p1961
  %1964 = shalt.err (%p1962)

</llo_original>
